<compile_context>
chip_gen: v7x
topology: tpu7x:2x2x1
jax: 0.10.0
libtpu: 0.0.40
codegen_flags: <defaults>
</compile_context>

<pallas_src>
import math

import jax
import jax.numpy as jnp
from jax import lax
from jax.experimental import pallas as pl
from jax.experimental.pallas import tpu as pltpu


# ---------------------------------------------------------------------------
# Kernel
# ---------------------------------------------------------------------------
def mlp_kernel(xT_ref, w1_ref, b1_ref, w2_ref, b2_ref,
               w3_ref, b3_ref, w4_ref, b4_ref, oT_ref):
    """Fused transposed MLP forward for one lane-dense batch tile.

    xT_ref: (2, Bt)   w_k: (out, in)   b_k: (out, 1)   oT_ref: (3, Bt)
    Computes o = W4 @ tanh(W3 @ tanh(W2 @ tanh(W1 @ x + b1) + b2) + b3) + b4.
    """
    xT = xT_ref[...]                                   # (2, Bt)

    # Layer 1: K=2 contraction as two VPU broadcast-FMAs (skip the MXU).
    w1 = w1_ref[...]                                   # (64, 2)
    h = jnp.tanh(w1[:, 0:1] * xT[0:1, :]
                 + w1[:, 1:2] * xT[1:2, :]
                 + b1_ref[...])                        # (64, Bt)

    # Layers 2-3: 64x64 MXU matmuls, full-f32 precision, tanh on the EUP.
    h = jnp.tanh(jnp.dot(w2_ref[...], h,
                         preferred_element_type=jnp.float32,
                         precision=lax.Precision.HIGHEST)
                 + b2_ref[...])                        # (64, Bt)
    h = jnp.tanh(jnp.dot(w3_ref[...], h,
                         preferred_element_type=jnp.float32,
                         precision=lax.Precision.HIGHEST)
                 + b3_ref[...])                        # (64, Bt)

    # Output layer: (3, 64) @ (64, Bt) -> (3, Bt); lane-dense unmasked stores.
    y = (jnp.dot(w4_ref[...], h,
                 preferred_element_type=jnp.float32,
                 precision=lax.Precision.HIGHEST)
         + b4_ref[...])
    oT_ref[...] = y.astype(oT_ref.dtype)


# ---------------------------------------------------------------------------
# Wrapper
# ---------------------------------------------------------------------------
def _round_up(n, m):
    return ((n + m - 1) // m) * m


def _choose_tiling(B, *, max_tile=8192):
    """Adaptive batch tiling (static, host-side).

    * B <= max_tile: one grid step (tile = round_up(B, 128)).  Per-tile
      working set is ~800 bytes/row, so even 8K rows is ~6.5 MiB of VMEM.
    * B  > max_tile: smallest EVEN number of steps (one per v7x TensorCore)
      with round_up(cdiv(B, n), 128) <= max_tile, keeping pad waste < 128*n.
    """
    if B <= max_tile:
        return max(_round_up(B, 128), 128), 1
    n_steps = 2
    while _round_up(-(-B // n_steps), 128) > max_tile:
        n_steps += 2
    return _round_up(-(-B // n_steps), 128), n_steps


def deeper_net_forward_T(xT, params, *, batch_tile=None):
    """Lane-dense entry point: xT (2, B) f32 -> (3, B) f32.

    Use this directly when the surrounding model keeps activations in
    (features, batch) layout end-to-end: it avoids all wrapper-side
    transpose HBM round-trips.
    """
    (w1, b1), (w2, b2), (w3, b3), (w4, b4) = params
    Fin, B = xT.shape
    Fout = w4.shape[0]

    if batch_tile is None:
        batch_tile, n_steps = _choose_tiling(B)
    else:
        batch_tile = _round_up(batch_tile, 128)
        n_steps = -(-B // batch_tile)
    Bp = batch_tile * n_steps

    if Bp != B:                                        # pad only when needed
        xT = jnp.pad(xT, ((0, 0), (0, Bp - B)))

    def full(arr):
        # Weight/bias blocks: whole array, same block every step -> resident.
        return pl.BlockSpec(arr.shape, lambda i: (0, 0))

    param_bytes = sum(w.size + b.size for (w, b) in params) * 4
    cost = pl.CostEstimate(
        flops=2 * Bp * (Fin * 64 + 64 * 64 + 64 * 64 + 64 * Fout),
        transcendentals=3 * 64 * Bp,
        bytes_accessed=Bp * (Fin + Fout) * 4 + param_bytes,
    )

    outT = pl.pallas_call(
        mlp_kernel,
        out_shape=jax.ShapeDtypeStruct((Fout, Bp), jnp.float32),
        grid_spec=pltpu.PrefetchScalarGridSpec(
            num_scalar_prefetch=0,
            grid=(n_steps,),
            in_specs=[
                pl.BlockSpec((Fin, batch_tile), lambda i: (0, i)),   # xT tile
                full(w1), full(b1),
                full(w2), full(b2),
                full(w3), full(b3),
                full(w4), full(b4),
            ],
            out_specs=pl.BlockSpec((Fout, batch_tile), lambda i: (0, i)),
        ),
        compiler_params=pltpu.CompilerParams(
            dimension_semantics=("parallel",),
            vmem_limit_bytes=32 << 20,
        ),
        cost_estimate=cost,
    )(xT, w1, b1, w2, b2, w3, b3, w4, b4)

    if Bp != B:
        outT = outT[:, :B]
    return outT


def deeper_net_forward(x, params, *, batch_tile=None):
    """PyTorch-layout entry point: x (B, 2) f32 -> (B, 3) f32."""
    # TODO(synk): the two transposes below are wrapper-side XLA ops; callers
    # able to keep (features, batch) layout should call deeper_net_forward_T.
    return deeper_net_forward_T(x.T, params, batch_tile=batch_tile).T


# ---------------------------------------------------------------------------
# Params + reference
# ---------------------------------------------------------------------------
def init_params(key):
    """Mirrors PyTorch: xavier_uniform_ weights, default nn.Linear bias init
    U(-1/sqrt(fan_in), 1/sqrt(fan_in)).  Weights stored PyTorch-style
    (out_features, in_features); biases stored as (out, 1) columns."""
    dims = [(2, 64), (64, 64), (64, 64), (64, 3)]
    params = []
    for (fan_in, fan_out) in dims:
        key, kw, kb = jax.random.split(key, 3)
        limit_w = math.sqrt(6.0 / (fan_in + fan_out))          # xavier_uniform_
        w = jax.random.uniform(kw, (fan_out, fan_in), jnp.float32,
                               minval=-limit_w, maxval=limit_w)
        limit_b = 1.0 / math.sqrt(fan_in)                      # torch bias default
        b = jax.random.uniform(kb, (fan_out, 1), jnp.float32,
                               minval=-limit_b, maxval=limit_b)
        params.append((w, b))
    return params


def reference_forward(x, params):
    """Plain-JAX reference (same HIGHEST matmul precision as the kernel)."""
    (w1, b1), (w2, b2), (w3, b3), (w4, b4) = params
    hp = lax.Precision.HIGHEST
    h = jnp.tanh(jnp.dot(x, w1.T, precision=hp) + b1.T)
    h = jnp.tanh(jnp.dot(h, w2.T, precision=hp) + b2.T)
    h = jnp.tanh(jnp.dot(h, w3.T, precision=hp) + b3.T)
    return jnp.dot(h, w4.T, precision=hp) + b4.T


if __name__ == "__main__":
    key = jax.random.PRNGKey(0)
    key, kx = jax.random.split(key)

    # Small demo batch: 128-aligned so it runs as a single lane-dense grid
    # step with zero padding (no wrapper pad op, no wasted compute).
    B = 256
    x = jax.random.normal(kx, (B, 2), jnp.float32)
    params = init_params(key)

    out = deeper_net_forward(x, params)
    out = jax.block_until_ready(out)

    ref = reference_forward(x, params)
    assert out.shape == (B, 3)
    assert jnp.allclose(out, ref, atol=1e-4, rtol=1e-5)

    print("KERNEL_OK")
</pallas_src>

<mosaic_0001>
module attributes {stable_mosaic.version = 11 : i64} {
  func.func @mlp_kernel(%arg0: i32, %arg1: memref<2x256xf32, #tpu.memory_space<vmem>>, %arg2: memref<64x2xf32, #tpu.memory_space<vmem>>, %arg3: memref<64x1xf32, #tpu.memory_space<vmem>>, %arg4: memref<64x64xf32, #tpu.memory_space<vmem>>, %arg5: memref<64x1xf32, #tpu.memory_space<vmem>>, %arg6: memref<64x64xf32, #tpu.memory_space<vmem>>, %arg7: memref<64x1xf32, #tpu.memory_space<vmem>>, %arg8: memref<3x64xf32, #tpu.memory_space<vmem>>, %arg9: memref<3x1xf32, #tpu.memory_space<vmem>>, %arg10: memref<3x256xf32, #tpu.memory_space<vmem>>) attributes {dimension_semantics = [#tpu.dimension_semantics<parallel>], iteration_bounds = array<i64: 1>, scalar_prefetch = 0 : i64, scratch_operands = 0 : i64, tpu.core_type = #tpu.core_type<tc>, window_params = [{transform_indices = @transform_0, window_bounds = array<i64: 2, 256>}, {pipeline_mode = #tpu.pipeline_mode<synchronous>, transform_indices = @transform_1, window_bounds = array<i64: 64, 2>}, {pipeline_mode = #tpu.pipeline_mode<synchronous>, transform_indices = @transform_2, window_bounds = array<i64: 64, 1>}, {pipeline_mode = #tpu.pipeline_mode<synchronous>, transform_indices = @transform_3, window_bounds = array<i64: 64, 64>}, {pipeline_mode = #tpu.pipeline_mode<synchronous>, transform_indices = @transform_4, window_bounds = array<i64: 64, 1>}, {pipeline_mode = #tpu.pipeline_mode<synchronous>, transform_indices = @transform_5, window_bounds = array<i64: 64, 64>}, {pipeline_mode = #tpu.pipeline_mode<synchronous>, transform_indices = @transform_6, window_bounds = array<i64: 64, 1>}, {pipeline_mode = #tpu.pipeline_mode<synchronous>, transform_indices = @transform_7, window_bounds = array<i64: 3, 64>}, {pipeline_mode = #tpu.pipeline_mode<synchronous>, transform_indices = @transform_8, window_bounds = array<i64: 3, 1>}, {transform_indices = @transform_9, window_bounds = array<i64: 3, 256>}]} {
    %c0 = arith.constant 0 : index
    %c0_0 = arith.constant 0 : index
    %0 = vector.load %arg1[%c0, %c0_0] : memref<2x256xf32, #tpu.memory_space<vmem>>, vector<2x256xf32>
    %c0_1 = arith.constant 0 : index
    %c0_2 = arith.constant 0 : index
    %1 = vector.load %arg2[%c0_1, %c0_2] : memref<64x2xf32, #tpu.memory_space<vmem>>, vector<64x2xf32>
    %2 = vector.extract_strided_slice %1 {offsets = [0, 0], sizes = [64, 1], strides = [1, 1]} : vector<64x2xf32> to vector<64x1xf32>
    %3 = vector.extract_strided_slice %0 {offsets = [0, 0], sizes = [1, 256], strides = [1, 1]} : vector<2x256xf32> to vector<1x256xf32>
    %4 = vector.broadcast %2 : vector<64x1xf32> to vector<64x256xf32>
    %5 = vector.broadcast %3 : vector<1x256xf32> to vector<64x256xf32>
    %6 = arith.mulf %4, %5 : vector<64x256xf32>
    %7 = vector.extract_strided_slice %1 {offsets = [0, 1], sizes = [64, 1], strides = [1, 1]} : vector<64x2xf32> to vector<64x1xf32>
    %8 = vector.extract_strided_slice %0 {offsets = [1, 0], sizes = [1, 256], strides = [1, 1]} : vector<2x256xf32> to vector<1x256xf32>
    %9 = vector.broadcast %7 : vector<64x1xf32> to vector<64x256xf32>
    %10 = vector.broadcast %8 : vector<1x256xf32> to vector<64x256xf32>
    %11 = arith.mulf %9, %10 : vector<64x256xf32>
    %12 = arith.addf %6, %11 : vector<64x256xf32>
    %c0_3 = arith.constant 0 : index
    %c0_4 = arith.constant 0 : index
    %13 = vector.load %arg3[%c0_3, %c0_4] : memref<64x1xf32, #tpu.memory_space<vmem>>, vector<64x1xf32>
    %14 = vector.broadcast %13 : vector<64x1xf32> to vector<64x256xf32>
    %15 = arith.addf %12, %14 : vector<64x256xf32>
    %16 = math.tanh %15 : vector<64x256xf32>
    %c0_5 = arith.constant 0 : index
    %c0_6 = arith.constant 0 : index
    %17 = vector.load %arg4[%c0_5, %c0_6] : memref<64x64xf32, #tpu.memory_space<vmem>>, vector<64x64xf32>
    %cst = arith.constant dense<0.000000e+00> : vector<64x256xf32>
    %18 = tpu.matmul %17, %16, %cst {dimension_numbers = #tpu.dot_dimension_numbers<[1], [0], [0], [1], [0, 0, 1, 1], [], []>, precision = #tpu.contract_precision<fp32>} : vector<64x64xf32>, vector<64x256xf32>, vector<64x256xf32> -> vector<64x256xf32>
    %c0_7 = arith.constant 0 : index
    %c0_8 = arith.constant 0 : index
    %19 = vector.load %arg5[%c0_7, %c0_8] : memref<64x1xf32, #tpu.memory_space<vmem>>, vector<64x1xf32>
    %20 = vector.broadcast %19 : vector<64x1xf32> to vector<64x256xf32>
    %21 = arith.addf %18, %20 : vector<64x256xf32>
    %22 = math.tanh %21 : vector<64x256xf32>
    %c0_9 = arith.constant 0 : index
    %c0_10 = arith.constant 0 : index
    %23 = vector.load %arg6[%c0_9, %c0_10] : memref<64x64xf32, #tpu.memory_space<vmem>>, vector<64x64xf32>
    %cst_11 = arith.constant dense<0.000000e+00> : vector<64x256xf32>
    %24 = tpu.matmul %23, %22, %cst_11 {dimension_numbers = #tpu.dot_dimension_numbers<[1], [0], [0], [1], [0, 0, 1, 1], [], []>, precision = #tpu.contract_precision<fp32>} : vector<64x64xf32>, vector<64x256xf32>, vector<64x256xf32> -> vector<64x256xf32>
    %c0_12 = arith.constant 0 : index
    %c0_13 = arith.constant 0 : index
    %25 = vector.load %arg7[%c0_12, %c0_13] : memref<64x1xf32, #tpu.memory_space<vmem>>, vector<64x1xf32>
    %26 = vector.broadcast %25 : vector<64x1xf32> to vector<64x256xf32>
    %27 = arith.addf %24, %26 : vector<64x256xf32>
    %28 = math.tanh %27 : vector<64x256xf32>
    %c0_14 = arith.constant 0 : index
    %c0_15 = arith.constant 0 : index
    %29 = vector.load %arg8[%c0_14, %c0_15] : memref<3x64xf32, #tpu.memory_space<vmem>>, vector<3x64xf32>
    %cst_16 = arith.constant dense<0.000000e+00> : vector<3x256xf32>
    %30 = tpu.matmul %29, %28, %cst_16 {dimension_numbers = #tpu.dot_dimension_numbers<[1], [0], [0], [1], [0, 0, 1, 1], [], []>, precision = #tpu.contract_precision<fp32>} : vector<3x64xf32>, vector<64x256xf32>, vector<3x256xf32> -> vector<3x256xf32>
    %c0_17 = arith.constant 0 : index
    %c0_18 = arith.constant 0 : index
    %31 = vector.load %arg9[%c0_17, %c0_18] : memref<3x1xf32, #tpu.memory_space<vmem>>, vector<3x1xf32>
    %32 = vector.broadcast %31 : vector<3x1xf32> to vector<3x256xf32>
    %33 = arith.addf %30, %32 : vector<3x256xf32>
    %c0_19 = arith.constant 0 : index
    %c0_20 = arith.constant 0 : index
    %34 = vector.load %arg10[%c0_19, %c0_20] : memref<3x256xf32, #tpu.memory_space<vmem>>, vector<3x256xf32>
    tpu.vector_store %arg10[%c0_19, %c0_20], %33 {strides = array<i32>} : memref<3x256xf32, #tpu.memory_space<vmem>>, vector<3x256xf32>,
    return
  }
  func.func @transform_0(%arg0: i32) -> (i32, i32) {
    %c0_i32 = arith.constant 0 : i32
    %c0_i32_0 = arith.constant 0 : i32
    return %c0_i32, %arg0 : i32, i32
  }
  func.func @transform_1(%arg0: i32) -> (i32, i32) {
    %c0_i32 = arith.constant 0 : i32
    %c0_i32_0 = arith.constant 0 : i32
    %c0_i32_1 = arith.constant 0 : i32
    return %c0_i32, %c0_i32_0 : i32, i32
  }
  func.func @transform_2(%arg0: i32) -> (i32, i32) {
    %c0_i32 = arith.constant 0 : i32
    %c0_i32_0 = arith.constant 0 : i32
    %c0_i32_1 = arith.constant 0 : i32
    return %c0_i32, %c0_i32_0 : i32, i32
  }
  func.func @transform_3(%arg0: i32) -> (i32, i32) {
    %c0_i32 = arith.constant 0 : i32
    %c0_i32_0 = arith.constant 0 : i32
    %c0_i32_1 = arith.constant 0 : i32
    return %c0_i32, %c0_i32_0 : i32, i32
  }
  func.func @transform_4(%arg0: i32) -> (i32, i32) {
    %c0_i32 = arith.constant 0 : i32
    %c0_i32_0 = arith.constant 0 : i32
    %c0_i32_1 = arith.constant 0 : i32
    return %c0_i32, %c0_i32_0 : i32, i32
  }
  func.func @transform_5(%arg0: i32) -> (i32, i32) {
    %c0_i32 = arith.constant 0 : i32
    %c0_i32_0 = arith.constant 0 : i32
    %c0_i32_1 = arith.constant 0 : i32
    return %c0_i32, %c0_i32_0 : i32, i32
  }
  func.func @transform_6(%arg0: i32) -> (i32, i32) {
    %c0_i32 = arith.constant 0 : i32
    %c0_i32_0 = arith.constant 0 : i32
    %c0_i32_1 = arith.constant 0 : i32
    return %c0_i32, %c0_i32_0 : i32, i32
  }
  func.func @transform_7(%arg0: i32) -> (i32, i32) {
    %c0_i32 = arith.constant 0 : i32
    %c0_i32_0 = arith.constant 0 : i32
    %c0_i32_1 = arith.constant 0 : i32
    return %c0_i32, %c0_i32_0 : i32, i32
  }
  func.func @transform_8(%arg0: i32) -> (i32, i32) {
    %c0_i32 = arith.constant 0 : i32
    %c0_i32_0 = arith.constant 0 : i32
    %c0_i32_1 = arith.constant 0 : i32
    return %c0_i32, %c0_i32_0 : i32, i32
  }
  func.func @transform_9(%arg0: i32) -> (i32, i32) {
    %c0_i32 = arith.constant 0 : i32
    %c0_i32_0 = arith.constant 0 : i32
    return %c0_i32, %arg0 : i32, i32
  }
}

</mosaic_0001>

<llo_original>
// kernel: tpu_custom_call.1
$region0: #{tpu_custom_call.1}
  #allocation0 [shape = 'u32[]', space=smem, size = 0x4, offset = 0x4, fixed_abs, tag = 'smem constant byte address 0x4 - core index']
  #allocation1 [shape = 'u32[144,128]{1,0:T(1,128)}', space=vmem, size = 0x12000, scoped, tag = 'internal scratch']
  %s0 = inlined_call_operand.vmem [shape: f32[2,256], index: 0, kind: input, shape index: {}]
  %s1 = inlined_call_operand.vmem [shape: f32[64,2], index: 1, kind: input, shape index: {}]
  %s2 = inlined_call_operand.vmem [shape: f32[64,1], index: 2, kind: input, shape index: {}]
  %s3 = inlined_call_operand.vmem [shape: f32[64,64], index: 3, kind: input, shape index: {}]
  %s4 = inlined_call_operand.vmem [shape: f32[64,1], index: 4, kind: input, shape index: {}]
  %s5 = inlined_call_operand.vmem [shape: f32[64,64], index: 5, kind: input, shape index: {}]
  %s6 = inlined_call_operand.vmem [shape: f32[64,1], index: 6, kind: input, shape index: {}]
  %s7 = inlined_call_operand.vmem [shape: f32[3,64], index: 7, kind: input, shape index: {}]
  %s8 = inlined_call_operand.vmem [shape: f32[3,1], index: 8, kind: input, shape index: {}]
  %s9 = inlined_call_operand.hbm [shape: f32[3,256], index: 9, kind: output, shape index: {}]
  %s10 = sld [smem:[#allocation0]]
  $region46: #{tpu_custom_call.1} parent=0
    _
  %s12 = ssub.s32 1, %s10
  %s13 = scalar_select 0, %s12, %s10
  $region1: #{tpu_custom_call.1} parent=0
    #allocation2 [shape = 'u8[4096]{0}', space=vmem, size = 0x1000, scoped, tag = 'output window, operand 0, single buffered']
    #allocation3 [shape = 's32[1]{0}', space=sflag, size = 0x4, scoped, tag = 'scoped memory for tpu_custom_call.1']
    %14 = vsyncpa [#allocation3], 0
    // Predicated region
    $region2: #{tpu_custom_call.1} parent=1 // pred_check
      _
    $region3: #{tpu_custom_call.1} parent=1 // pred_check_branch
      %16 = sbr.rel (0) target = $region5
    $region4: #{tpu_custom_call.1} parent=1 // pred_region
      _
    $region5: #{tpu_custom_call.1} parent=1 // pred_fallthru
      _
    // Predicated region
    $region6: #{tpu_custom_call.1} parent=1 // pred_check
      _
    $region7: #{tpu_custom_call.1} parent=1 // pred_check_branch
      %18 = sbr.rel (0) target = $region9
    $region8: #{tpu_custom_call.1} parent=1 // pred_region
      _
    $region9: #{tpu_custom_call.1} parent=1 // pred_fallthru
      _
    // Predicated region
    $region10: #{tpu_custom_call.1} parent=1 // pred_check
      _
    $region11: #{tpu_custom_call.1} parent=1 // pred_check_branch
      %20 = sbr.rel (0) target = $region13
    $region12: #{tpu_custom_call.1} parent=1 // pred_region
      _
    $region13: #{tpu_custom_call.1} parent=1 // pred_fallthru
      _
    // Predicated region
    $region14: #{tpu_custom_call.1} parent=1 // pred_check
      _
    $region15: #{tpu_custom_call.1} parent=1 // pred_check_branch
      %22 = sbr.rel (0) target = $region17
    $region16: #{tpu_custom_call.1} parent=1 // pred_region
      _
    $region17: #{tpu_custom_call.1} parent=1 // pred_fallthru
      _
    // Predicated region
    $region18: #{tpu_custom_call.1} parent=1 // pred_check
      _
    $region19: #{tpu_custom_call.1} parent=1 // pred_check_branch
      %24 = sbr.rel (0) target = $region21
    $region20: #{tpu_custom_call.1} parent=1 // pred_region
      _
    $region21: #{tpu_custom_call.1} parent=1 // pred_fallthru
      _
    // Predicated region
    $region22: #{tpu_custom_call.1} parent=1 // pred_check
      _
    $region23: #{tpu_custom_call.1} parent=1 // pred_check_branch
      %26 = sbr.rel (0) target = $region25
    $region24: #{tpu_custom_call.1} parent=1 // pred_region
      _
    $region25: #{tpu_custom_call.1} parent=1 // pred_fallthru
      _
    // Predicated region
    $region26: #{tpu_custom_call.1} parent=1 // pred_check
      _
    $region27: #{tpu_custom_call.1} parent=1 // pred_check_branch
      %28 = sbr.rel (0) target = $region29
    $region28: #{tpu_custom_call.1} parent=1 // pred_region
      _
    $region29: #{tpu_custom_call.1} parent=1 // pred_fallthru
      _
    // Predicated region
    $region30: #{tpu_custom_call.1} parent=1 // pred_check
      _
    $region31: #{tpu_custom_call.1} parent=1 // pred_check_branch
      %30 = sbr.rel (0) target = $region33
    $region32: #{tpu_custom_call.1} parent=1 // pred_region
      _
    $region33: #{tpu_custom_call.1} parent=1 // pred_fallthru
      _
    // Predicated region
    $region34: #{tpu_custom_call.1} parent=1 // pred_check
      _
    $region35: #{tpu_custom_call.1} parent=1 // pred_check_branch
      %32 = sbr.rel (0) target = $region37
    $region36: #{tpu_custom_call.1} parent=1 // pred_region
      _
    $region37: #{tpu_custom_call.1} parent=1 // pred_fallthru
      _
    %v33 = vld [vmem:[%s0] sm:$0xf]
    %v34 = vld [vmem:[%s1] sm:$0xff]
    %v35 = vld [vmem:[%s1 + $0x8] sm:$0xff]
    %v36 = vld [vmem:[%s1 + $0x10] sm:$0xff]
    %v37 = vld [vmem:[%s1 + $0x18] sm:$0xff]
    %v38 = vld [vmem:[%s1 + $0x20] sm:$0xff]
    %v39 = vld [vmem:[%s1 + $0x28] sm:$0xff]
    %v40 = vld [vmem:[%s1 + $0x30] sm:$0xff]
    %v41 = vld [vmem:[%s1 + $0x38] sm:$0xff]
    %43 = vset.pattern.permute.xlu0 0
    %44 = vperm.xlu0 %43, %v34
    %v45 = vpop.permute.xlu0 %44
    %48 = vset.pattern.permute.xlu0 0
    %49 = vperm.xlu0 %48, %v35
    %v50 = vpop.permute.xlu0 %49
    %53 = vset.pattern.permute.xlu0 0
    %54 = vperm.xlu0 %53, %v36
    %v55 = vpop.permute.xlu0 %54
    %58 = vset.pattern.permute.xlu0 0
    %59 = vperm.xlu0 %58, %v37
    %v60 = vpop.permute.xlu0 %59
    %63 = vset.pattern.permute.xlu0 0
    %64 = vperm.xlu0 %63, %v38
    %v65 = vpop.permute.xlu0 %64
    %68 = vset.pattern.permute.xlu0 0
    %69 = vperm.xlu0 %68, %v39
    %v70 = vpop.permute.xlu0 %69
    %73 = vset.pattern.permute.xlu0 0
    %74 = vperm.xlu0 %73, %v40
    %v75 = vpop.permute.xlu0 %74
    %78 = vset.pattern.permute.xlu0 0
    %79 = vperm.xlu0 %78, %v41
    %v80 = vpop.permute.xlu0 %79
    %v83 = vlaneseq
    %v84 = vshrl.u32 %v83, 7
    %v85 = vsub.s32 0, %v84
    %v86 = vrot.slane %v33, %v85
    %v87 = vlaneseq
    %v88 = vshrl.u32 %v87, 7
    %v89 = vsub.s32 2, %v88
    %v90 = vrot.slane %v33, %v89
    %v93 = vlaneseq
    %v94 = vshrl.u32 %v93, 7
    %v95 = vsub.s32 0, %v94
    %v96 = vrot.slane %v86, %v95
    %v97 = vlaneseq
    %v98 = vshrl.u32 %v97, 7
    %v99 = vsub.s32 0, %v98
    %v100 = vrot.slane %v90, %v99
    %v101 = vmul.f32 %v45, %v96
    %v102 = vmul.f32 %v45, %v100
    %v103 = vmul.f32 %v50, %v96
    %v104 = vmul.f32 %v50, %v100
    %v105 = vmul.f32 %v55, %v96
    %v106 = vmul.f32 %v55, %v100
    %v107 = vmul.f32 %v60, %v96
    %v108 = vmul.f32 %v60, %v100
    %v109 = vmul.f32 %v65, %v96
    %v110 = vmul.f32 %v65, %v100
    %v111 = vmul.f32 %v70, %v96
    %v112 = vmul.f32 %v70, %v100
    %v113 = vmul.f32 %v75, %v96
    %v114 = vmul.f32 %v75, %v100
    %v115 = vmul.f32 %v80, %v96
    %v116 = vmul.f32 %v80, %v100
    %117 = vset.pattern.permute.xlu0 1
    %118 = vperm.xlu0 %117, %v34
    %v119 = vpop.permute.xlu0 %118
    %121 = vset.pattern.permute.xlu0 1
    %122 = vperm.xlu0 %121, %v35
    %v123 = vpop.permute.xlu0 %122
    %125 = vset.pattern.permute.xlu0 1
    %126 = vperm.xlu0 %125, %v36
    %v127 = vpop.permute.xlu0 %126
    %129 = vset.pattern.permute.xlu0 1
    %130 = vperm.xlu0 %129, %v37
    %v131 = vpop.permute.xlu0 %130
    %133 = vset.pattern.permute.xlu0 1
    %134 = vperm.xlu0 %133, %v38
    %v135 = vpop.permute.xlu0 %134
    %137 = vset.pattern.permute.xlu0 1
    %138 = vperm.xlu0 %137, %v39
    %v139 = vpop.permute.xlu0 %138
    %141 = vset.pattern.permute.xlu0 1
    %142 = vperm.xlu0 %141, %v40
    %v143 = vpop.permute.xlu0 %142
    %145 = vset.pattern.permute.xlu0 1
    %146 = vperm.xlu0 %145, %v41
    %v147 = vpop.permute.xlu0 %146
    %v149 = vlaneseq
    %v150 = vshrl.u32 %v149, 7
    %v151 = vsub.s32 1, %v150
    %v152 = vrot.slane %v33, %v151
    %v153 = vlaneseq
    %v154 = vshrl.u32 %v153, 7
    %v155 = vsub.s32 3, %v154
    %v156 = vrot.slane %v33, %v155
    %v159 = vlaneseq
    %v160 = vshrl.u32 %v159, 7
    %v161 = vsub.s32 1, %v160
    %v162 = vrot.slane %v152, %v161
    %v163 = vlaneseq
    %v164 = vshrl.u32 %v163, 7
    %v165 = vsub.s32 1, %v164
    %v166 = vrot.slane %v156, %v165
    %v167 = vmul.f32 %v119, %v162
    %v168 = vmul.f32 %v119, %v166
    %v169 = vmul.f32 %v123, %v162
    %v170 = vmul.f32 %v123, %v166
    %v171 = vmul.f32 %v127, %v162
    %v172 = vmul.f32 %v127, %v166
    %v173 = vmul.f32 %v131, %v162
    %v174 = vmul.f32 %v131, %v166
    %v175 = vmul.f32 %v135, %v162
    %v176 = vmul.f32 %v135, %v166
    %v177 = vmul.f32 %v139, %v162
    %v178 = vmul.f32 %v139, %v166
    %v179 = vmul.f32 %v143, %v162
    %v180 = vmul.f32 %v143, %v166
    %v181 = vmul.f32 %v147, %v162
    %v182 = vmul.f32 %v147, %v166
    %v183 = vadd.f32 %v101, %v167
    %v184 = vadd.f32 %v102, %v168
    %v185 = vadd.f32 %v103, %v169
    %v186 = vadd.f32 %v104, %v170
    %v187 = vadd.f32 %v105, %v171
    %v188 = vadd.f32 %v106, %v172
    %v189 = vadd.f32 %v107, %v173
    %v190 = vadd.f32 %v108, %v174
    %v191 = vadd.f32 %v109, %v175
    %v192 = vadd.f32 %v110, %v176
    %v193 = vadd.f32 %v111, %v177
    %v194 = vadd.f32 %v112, %v178
    %v195 = vadd.f32 %v113, %v179
    %v196 = vadd.f32 %v114, %v180
    %v197 = vadd.f32 %v115, %v181
    %v198 = vadd.f32 %v116, %v182
    %v199 = vld [vmem:[%s2] sm:$0xff]
    %v200 = vld [vmem:[%s2 + $0x8] sm:$0xff]
    %v201 = vld [vmem:[%s2 + $0x10] sm:$0xff]
    %v202 = vld [vmem:[%s2 + $0x18] sm:$0xff]
    %v203 = vld [vmem:[%s2 + $0x20] sm:$0xff]
    %v204 = vld [vmem:[%s2 + $0x28] sm:$0xff]
    %v205 = vld [vmem:[%s2 + $0x30] sm:$0xff]
    %v206 = vld [vmem:[%s2 + $0x38] sm:$0xff]
    %208 = vset.pattern.permute.xlu0 0
    %209 = vperm.xlu0 %208, %v199
    %v210 = vpop.permute.xlu0 %209
    %213 = vset.pattern.permute.xlu0 0
    %214 = vperm.xlu0 %213, %v200
    %v215 = vpop.permute.xlu0 %214
    %218 = vset.pattern.permute.xlu0 0
    %219 = vperm.xlu0 %218, %v201
    %v220 = vpop.permute.xlu0 %219
    %223 = vset.pattern.permute.xlu0 0
    %224 = vperm.xlu0 %223, %v202
    %v225 = vpop.permute.xlu0 %224
    %228 = vset.pattern.permute.xlu0 0
    %229 = vperm.xlu0 %228, %v203
    %v230 = vpop.permute.xlu0 %229
    %233 = vset.pattern.permute.xlu0 0
    %234 = vperm.xlu0 %233, %v204
    %v235 = vpop.permute.xlu0 %234
    %238 = vset.pattern.permute.xlu0 0
    %239 = vperm.xlu0 %238, %v205
    %v240 = vpop.permute.xlu0 %239
    %243 = vset.pattern.permute.xlu0 0
    %244 = vperm.xlu0 %243, %v206
    %v245 = vpop.permute.xlu0 %244
    %v247 = vadd.f32 %v183, %v210
    %v248 = vadd.f32 %v184, %v210
    %v249 = vadd.f32 %v185, %v215
    %v250 = vadd.f32 %v186, %v215
    %v251 = vadd.f32 %v187, %v220
    %v252 = vadd.f32 %v188, %v220
    %v253 = vadd.f32 %v189, %v225
    %v254 = vadd.f32 %v190, %v225
    %v255 = vadd.f32 %v191, %v230
    %v256 = vadd.f32 %v192, %v230
    %v257 = vadd.f32 %v193, %v235
    %v258 = vadd.f32 %v194, %v235
    %v259 = vadd.f32 %v195, %v240
    %v260 = vadd.f32 %v196, %v240
    %v261 = vadd.f32 %v197, %v245
    %v262 = vadd.f32 %v198, %v245
    %v263 = vtanh.pop %v247
    %v264 = vtanh.pop %v248
    %v265 = vtanh.pop %v249
    %v266 = vtanh.pop %v250
    %v267 = vtanh.pop %v251
    %v268 = vtanh.pop %v252
    %v269 = vtanh.pop %v253
    %v270 = vtanh.pop %v254
    %v271 = vtanh.pop %v255
    %v272 = vtanh.pop %v256
    %v273 = vtanh.pop %v257
    %v274 = vtanh.pop %v258
    %v275 = vtanh.pop %v259
    %v276 = vtanh.pop %v260
    %v277 = vtanh.pop %v261
    %v278 = vtanh.pop %v262
    %v279 = vld [vmem:[%s3] sm:$0xff]
    %v280 = vld [vmem:[%s3 + $0x8] sm:$0xff]
    %v281 = vld [vmem:[%s3 + $0x10] sm:$0xff]
    %v282 = vld [vmem:[%s3 + $0x18] sm:$0xff]
    %v283 = vld [vmem:[%s3 + $0x20] sm:$0xff]
    %v284 = vld [vmem:[%s3 + $0x28] sm:$0xff]
    %v285 = vld [vmem:[%s3 + $0x30] sm:$0xff]
    %v286 = vld [vmem:[%s3 + $0x38] sm:$0xff]
    %v287 = vld [vmem:[%s4] sm:$0xff]
    %v288 = vld [vmem:[%s4 + $0x8] sm:$0xff]
    %v289 = vld [vmem:[%s4 + $0x10] sm:$0xff]
    %v290 = vld [vmem:[%s4 + $0x18] sm:$0xff]
    %v291 = vld [vmem:[%s4 + $0x20] sm:$0xff]
    %v292 = vld [vmem:[%s4 + $0x28] sm:$0xff]
    %v293 = vld [vmem:[%s4 + $0x30] sm:$0xff]
    %v294 = vld [vmem:[%s4 + $0x38] sm:$0xff]
    %296 = vset.pattern.permute.xlu0 0
    %297 = vperm.xlu0 %296, %v287
    %v298 = vpop.permute.xlu0 %297
    %301 = vset.pattern.permute.xlu0 0
    %302 = vperm.xlu0 %301, %v288
    %v303 = vpop.permute.xlu0 %302
    %306 = vset.pattern.permute.xlu0 0
    %307 = vperm.xlu0 %306, %v289
    %v308 = vpop.permute.xlu0 %307
    %311 = vset.pattern.permute.xlu0 0
    %312 = vperm.xlu0 %311, %v290
    %v313 = vpop.permute.xlu0 %312
    %316 = vset.pattern.permute.xlu0 0
    %317 = vperm.xlu0 %316, %v291
    %v318 = vpop.permute.xlu0 %317
    %321 = vset.pattern.permute.xlu0 0
    %322 = vperm.xlu0 %321, %v292
    %v323 = vpop.permute.xlu0 %322
    %326 = vset.pattern.permute.xlu0 0
    %327 = vperm.xlu0 %326, %v293
    %v328 = vpop.permute.xlu0 %327
    %331 = vset.pattern.permute.xlu0 0
    %332 = vperm.xlu0 %331, %v294
    %v333 = vpop.permute.xlu0 %332
    %vm335 = vcmask 523264
    %v337 = vsel %vm335, %v279, 0
    %v340 = vsel %vm335, %v280, 0
    %v343 = vsel %vm335, %v281, 0
    %v346 = vsel %vm335, %v282, 0
    %v349 = vsel %vm335, %v283, 0
    %v352 = vsel %vm335, %v284, 0
    %v355 = vsel %vm335, %v285, 0
    %v358 = vsel %vm335, %v286, 0
    %v360 = vand.u32 %v264, 4294901760
    %361 = vmatprep.subr.mxu0 %v360
    %v362 = vand.u32 %v263, 4294901760
    %363 = vmatpush1.msra.mxu0 %v362
    %v364 = vand.u32 %v266, 4294901760
    %365 = vmatprep.subr.mxu0 %v364
    %v366 = vand.u32 %v265, 4294901760
    %367 = vmatpush1.msra.mxu0 %v366
    %v368 = vand.u32 %v268, 4294901760
    %369 = vmatprep.subr.mxu0 %v368
    %v370 = vand.u32 %v267, 4294901760
    %371 = vmatpush1.msra.mxu0 %v370
    %v372 = vand.u32 %v270, 4294901760
    %373 = vmatprep.subr.mxu0 %v372
    %v374 = vand.u32 %v269, 4294901760
    %375 = vmatpush1.msra.mxu0 %v374
    %v376 = vand.u32 %v272, 4294901760
    %377 = vmatprep.subr.mxu0 %v376
    %v378 = vand.u32 %v271, 4294901760
    %379 = vmatpush1.msra.mxu0 %v378
    %v380 = vand.u32 %v274, 4294901760
    %381 = vmatprep.subr.mxu0 %v380
    %v382 = vand.u32 %v273, 4294901760
    %383 = vmatpush1.msra.mxu0 %v382
    %v384 = vand.u32 %v276, 4294901760
    %385 = vmatprep.subr.mxu0 %v384
    %v386 = vand.u32 %v275, 4294901760
    %387 = vmatpush1.msra.mxu0 %v386
    %v388 = vand.u32 %v278, 4294901760
    %389 = vmatprep.subr.mxu0 %v388
    %v390 = vand.u32 %v277, 4294901760
    %391 = vmatpush1.msra.mxu0 %v390
    %392 = vmatprep.subr.mxu0 0.0
    %393 = vmatpush1.msra.mxu0 0.0
    %394 = vmatprep.subr.mxu0 0.0
    %395 = vmatpush1.msra.mxu0 0.0
    %396 = vmatprep.subr.mxu0 0.0
    %397 = vmatpush1.msra.mxu0 0.0
    %398 = vmatprep.subr.mxu0 0.0
    %399 = vmatpush1.msra.mxu0 0.0
    %400 = vmatprep.subr.mxu0 0.0
    %401 = vmatpush1.msra.mxu0 0.0
    %402 = vmatprep.subr.mxu0 0.0
    %403 = vmatpush1.msra.mxu0 0.0
    %404 = vmatprep.subr.mxu0 0.0
    %405 = vmatpush1.msra.mxu0 0.0
    %406 = vmatprep.subr.mxu0 0.0
    %407 = vmatpush1.msra.mxu0 0.0
    %408 = vmatprep.subr.mxu0 0.0
    %409 = vmatpush1.msra.mxu0 0.0
    %410 = vmatprep.subr.mxu0 0.0
    %411 = vmatpush1.msra.mxu0 0.0
    %412 = vmatprep.subr.mxu0 0.0
    %413 = vmatpush1.msra.mxu0 0.0
    %414 = vmatprep.subr.mxu0 0.0
    %415 = vmatpush1.msra.mxu0 0.0
    %416 = vmatprep.subr.mxu0 0.0
    %417 = vmatpush1.msra.mxu0 0.0
    %418 = vmatprep.subr.mxu0 0.0
    %419 = vmatpush1.msra.mxu0 0.0
    %420 = vmatprep.subr.mxu0 0.0
    %421 = vmatpush1.msra.mxu0 0.0
    %422 = vmatprep.subr.mxu0 0.0
    %423 = vmatpush1.msra.mxu0 0.0
    %424 = vmatprep.subr.mxu0 0.0
    %425 = vmatpush1.msra.mxu0 0.0
    %426 = vmatprep.subr.mxu0 0.0
    %427 = vmatpush1.msra.mxu0 0.0
    %428 = vmatprep.subr.mxu0 0.0
    %429 = vmatpush1.msra.mxu0 0.0
    %430 = vmatprep.subr.mxu0 0.0
    %431 = vmatpush1.msra.mxu0 0.0
    %432 = vmatprep.subr.mxu0 0.0
    %433 = vmatpush1.msra.mxu0 0.0
    %434 = vmatprep.subr.mxu0 0.0
    %435 = vmatpush1.msra.mxu0 0.0
    %436 = vmatprep.subr.mxu0 0.0
    %437 = vmatpush1.msra.mxu0 0.0
    %438 = vmatprep.subr.mxu0 0.0
    %439 = vmatpush1.msra.mxu0 0.0
    %440 = vmatprep.mubr.f32.mxu0 0.0
    %v441 = vand.u32 %v337, 4294901760
    %v442 = vsub.f32 %v337, %v441
    %v443 = vand.u32 %v442, 4294901760
    %v444 = vsub.f32 %v442, %v443
    %v445 = vand.u32 %v444, 4294901760
    %446 = vmatmul.mubr.f32.gmra.mrb[0].mxu0 %v445
    %v447 = vpop.f32.mrb[0].mxu0
    %v448 = vadd.f32 %v298, %v447
    %v449 = vpop.f32.mrb[0].mxu0
    %v450 = vadd.f32 %v298, %v449
    %451 = vmatprep.mubr.f32.mxu0 0.0
    %v452 = vand.u32 %v340, 4294901760
    %v453 = vsub.f32 %v340, %v452
    %v454 = vand.u32 %v453, 4294901760
    %v455 = vsub.f32 %v453, %v454
    %v456 = vand.u32 %v455, 4294901760
    %457 = vmatmul.mubr.f32.gmra.mrb[0].mxu0 %v456
    %v458 = vpop.f32.mrb[0].mxu0
    %v459 = vadd.f32 %v303, %v458
    %v460 = vpop.f32.mrb[0].mxu0
    %v461 = vadd.f32 %v303, %v460
    %462 = vmatprep.mubr.f32.mxu0 0.0
    %v463 = vand.u32 %v343, 4294901760
    %v464 = vsub.f32 %v343, %v463
    %v465 = vand.u32 %v464, 4294901760
    %v466 = vsub.f32 %v464, %v465
    %v467 = vand.u32 %v466, 4294901760
    %468 = vmatmul.mubr.f32.gmra.mrb[0].mxu0 %v467
    %v469 = vpop.f32.mrb[0].mxu0
    %v470 = vadd.f32 %v308, %v469
    %v471 = vpop.f32.mrb[0].mxu0
    %v472 = vadd.f32 %v308, %v471
    %473 = vmatprep.mubr.f32.mxu0 0.0
    %v474 = vand.u32 %v346, 4294901760
    %v475 = vsub.f32 %v346, %v474
    %v476 = vand.u32 %v475, 4294901760
    %v477 = vsub.f32 %v475, %v476
    %v478 = vand.u32 %v477, 4294901760
    %479 = vmatmul.mubr.f32.gmra.mrb[0].mxu0 %v478
    %v480 = vpop.f32.mrb[0].mxu0
    %v481 = vadd.f32 %v313, %v480
    %v482 = vpop.f32.mrb[0].mxu0
    %v483 = vadd.f32 %v313, %v482
    %484 = vmatprep.mubr.f32.mxu0 0.0
    %v485 = vand.u32 %v349, 4294901760
    %v486 = vsub.f32 %v349, %v485
    %v487 = vand.u32 %v486, 4294901760
    %v488 = vsub.f32 %v486, %v487
    %v489 = vand.u32 %v488, 4294901760
    %490 = vmatmul.mubr.f32.gmra.mrb[0].mxu0 %v489
    %v491 = vpop.f32.mrb[0].mxu0
    %v492 = vadd.f32 %v318, %v491
    %v493 = vpop.f32.mrb[0].mxu0
    %v494 = vadd.f32 %v318, %v493
    %495 = vmatprep.mubr.f32.mxu0 0.0
    %v496 = vand.u32 %v352, 4294901760
    %v497 = vsub.f32 %v352, %v496
    %v498 = vand.u32 %v497, 4294901760
    %v499 = vsub.f32 %v497, %v498
    %v500 = vand.u32 %v499, 4294901760
    %501 = vmatmul.mubr.f32.gmra.mrb[0].mxu0 %v500
    %v502 = vpop.f32.mrb[0].mxu0
    %v503 = vadd.f32 %v323, %v502
    %v504 = vpop.f32.mrb[0].mxu0
    %v505 = vadd.f32 %v323, %v504
    %506 = vmatprep.mubr.f32.mxu0 0.0
    %v507 = vand.u32 %v355, 4294901760
    %v508 = vsub.f32 %v355, %v507
    %v509 = vand.u32 %v508, 4294901760
    %v510 = vsub.f32 %v508, %v509
    %v511 = vand.u32 %v510, 4294901760
    %512 = vmatmul.mubr.f32.gmra.mrb[0].mxu0 %v511
    %v513 = vpop.f32.mrb[0].mxu0
    %v514 = vadd.f32 %v328, %v513
    %v515 = vpop.f32.mrb[0].mxu0
    %v516 = vadd.f32 %v328, %v515
    %517 = vmatprep.mubr.f32.mxu0 0.0
    %v518 = vand.u32 %v358, 4294901760
    %v519 = vsub.f32 %v358, %v518
    %v520 = vand.u32 %v519, 4294901760
    %v521 = vsub.f32 %v519, %v520
    %v522 = vand.u32 %v521, 4294901760
    %523 = vmatmul.mubr.f32.gmra.mrb[0].mxu0 %v522
    %v524 = vpop.f32.mrb[0].mxu0
    %v525 = vadd.f32 %v333, %v524
    %v526 = vpop.f32.mrb[0].mxu0
    %v527 = vadd.f32 %v333, %v526
    %528 = vdwg.mxu0
    %v529 = vand.u32 %v264, 4294901760
    %v530 = vsub.f32 %v264, %v529
    %v531 = vand.u32 %v530, 4294901760
    %v532 = vsub.f32 %v530, %v531
    %v533 = vand.u32 %v532, 4294901760
    %534 = vmatprep.subr.mxu0 %v533
    %v535 = vand.u32 %v263, 4294901760
    %v536 = vsub.f32 %v263, %v535
    %v537 = vand.u32 %v536, 4294901760
    %v538 = vsub.f32 %v536, %v537
    %v539 = vand.u32 %v538, 4294901760
    %540 = vmatpush1.msra.mxu0 %v539
    %v541 = vand.u32 %v266, 4294901760
    %v542 = vsub.f32 %v266, %v541
    %v543 = vand.u32 %v542, 4294901760
    %v544 = vsub.f32 %v542, %v543
    %v545 = vand.u32 %v544, 4294901760
    %546 = vmatprep.subr.mxu0 %v545
    %v547 = vand.u32 %v265, 4294901760
    %v548 = vsub.f32 %v265, %v547
    %v549 = vand.u32 %v548, 4294901760
    %v550 = vsub.f32 %v548, %v549
    %v551 = vand.u32 %v550, 4294901760
    %552 = vmatpush1.msra.mxu0 %v551
    %v553 = vand.u32 %v268, 4294901760
    %v554 = vsub.f32 %v268, %v553
    %v555 = vand.u32 %v554, 4294901760
    %v556 = vsub.f32 %v554, %v555
    %v557 = vand.u32 %v556, 4294901760
    %558 = vmatprep.subr.mxu0 %v557
    %v559 = vand.u32 %v267, 4294901760
    %v560 = vsub.f32 %v267, %v559
    %v561 = vand.u32 %v560, 4294901760
    %v562 = vsub.f32 %v560, %v561
    %v563 = vand.u32 %v562, 4294901760
    %564 = vmatpush1.msra.mxu0 %v563
    %v565 = vand.u32 %v270, 4294901760
    %v566 = vsub.f32 %v270, %v565
    %v567 = vand.u32 %v566, 4294901760
    %v568 = vsub.f32 %v566, %v567
    %v569 = vand.u32 %v568, 4294901760
    %570 = vmatprep.subr.mxu0 %v569
    %v571 = vand.u32 %v269, 4294901760
    %v572 = vsub.f32 %v269, %v571
    %v573 = vand.u32 %v572, 4294901760
    %v574 = vsub.f32 %v572, %v573
    %v575 = vand.u32 %v574, 4294901760
    %576 = vmatpush1.msra.mxu0 %v575
    %v577 = vand.u32 %v272, 4294901760
    %v578 = vsub.f32 %v272, %v577
    %v579 = vand.u32 %v578, 4294901760
    %v580 = vsub.f32 %v578, %v579
    %v581 = vand.u32 %v580, 4294901760
    %582 = vmatprep.subr.mxu0 %v581
    %v583 = vand.u32 %v271, 4294901760
    %v584 = vsub.f32 %v271, %v583
    %v585 = vand.u32 %v584, 4294901760
    %v586 = vsub.f32 %v584, %v585
    %v587 = vand.u32 %v586, 4294901760
    %588 = vmatpush1.msra.mxu0 %v587
    %v589 = vand.u32 %v274, 4294901760
    %v590 = vsub.f32 %v274, %v589
    %v591 = vand.u32 %v590, 4294901760
    %v592 = vsub.f32 %v590, %v591
    %v593 = vand.u32 %v592, 4294901760
    %594 = vmatprep.subr.mxu0 %v593
    %v595 = vand.u32 %v273, 4294901760
    %v596 = vsub.f32 %v273, %v595
    %v597 = vand.u32 %v596, 4294901760
    %v598 = vsub.f32 %v596, %v597
    %v599 = vand.u32 %v598, 4294901760
    %600 = vmatpush1.msra.mxu0 %v599
    %v601 = vand.u32 %v276, 4294901760
    %v602 = vsub.f32 %v276, %v601
    %v603 = vand.u32 %v602, 4294901760
    %v604 = vsub.f32 %v602, %v603
    %v605 = vand.u32 %v604, 4294901760
    %606 = vmatprep.subr.mxu0 %v605
    %v607 = vand.u32 %v275, 4294901760
    %v608 = vsub.f32 %v275, %v607
    %v609 = vand.u32 %v608, 4294901760
    %v610 = vsub.f32 %v608, %v609
    %v611 = vand.u32 %v610, 4294901760
    %612 = vmatpush1.msra.mxu0 %v611
    %v613 = vand.u32 %v278, 4294901760
    %v614 = vsub.f32 %v278, %v613
    %v615 = vand.u32 %v614, 4294901760
    %v616 = vsub.f32 %v614, %v615
    %v617 = vand.u32 %v616, 4294901760
    %618 = vmatprep.subr.mxu0 %v617
    %v619 = vand.u32 %v277, 4294901760
    %v620 = vsub.f32 %v277, %v619
    %v621 = vand.u32 %v620, 4294901760
    %v622 = vsub.f32 %v620, %v621
    %v623 = vand.u32 %v622, 4294901760
    %624 = vmatpush1.msra.mxu0 %v623
    %625 = vmatprep.subr.mxu0 0.0
    %626 = vmatpush1.msra.mxu0 0.0
    %627 = vmatprep.subr.mxu0 0.0
    %628 = vmatpush1.msra.mxu0 0.0
    %629 = vmatprep.subr.mxu0 0.0
    %630 = vmatpush1.msra.mxu0 0.0
    %631 = vmatprep.subr.mxu0 0.0
    %632 = vmatpush1.msra.mxu0 0.0
    %633 = vmatprep.subr.mxu0 0.0
    %634 = vmatpush1.msra.mxu0 0.0
    %635 = vmatprep.subr.mxu0 0.0
    %636 = vmatpush1.msra.mxu0 0.0
    %637 = vmatprep.subr.mxu0 0.0
    %638 = vmatpush1.msra.mxu0 0.0
    %639 = vmatprep.subr.mxu0 0.0
    %640 = vmatpush1.msra.mxu0 0.0
    %641 = vmatprep.subr.mxu0 0.0
    %642 = vmatpush1.msra.mxu0 0.0
    %643 = vmatprep.subr.mxu0 0.0
    %644 = vmatpush1.msra.mxu0 0.0
    %645 = vmatprep.subr.mxu0 0.0
    %646 = vmatpush1.msra.mxu0 0.0
    %647 = vmatprep.subr.mxu0 0.0
    %648 = vmatpush1.msra.mxu0 0.0
    %649 = vmatprep.subr.mxu0 0.0
    %650 = vmatpush1.msra.mxu0 0.0
    %651 = vmatprep.subr.mxu0 0.0
    %652 = vmatpush1.msra.mxu0 0.0
    %653 = vmatprep.subr.mxu0 0.0
    %654 = vmatpush1.msra.mxu0 0.0
    %655 = vmatprep.subr.mxu0 0.0
    %656 = vmatpush1.msra.mxu0 0.0
    %657 = vmatprep.subr.mxu0 0.0
    %658 = vmatpush1.msra.mxu0 0.0
    %659 = vmatprep.subr.mxu0 0.0
    %660 = vmatpush1.msra.mxu0 0.0
    %661 = vmatprep.subr.mxu0 0.0
    %662 = vmatpush1.msra.mxu0 0.0
    %663 = vmatprep.subr.mxu0 0.0
    %664 = vmatpush1.msra.mxu0 0.0
    %665 = vmatprep.subr.mxu0 0.0
    %666 = vmatpush1.msra.mxu0 0.0
    %667 = vmatprep.subr.mxu0 0.0
    %668 = vmatpush1.msra.mxu0 0.0
    %669 = vmatprep.subr.mxu0 0.0
    %670 = vmatpush1.msra.mxu0 0.0
    %671 = vmatprep.subr.mxu0 0.0
    %672 = vmatpush1.msra.mxu0 0.0
    %673 = vmatprep.mubr.f32.mxu0 0.0
    %v674 = vand.u32 %v337, 4294901760
    %675 = vmatmul.mubr.f32.gmra.mrb[0].mxu0 %v674
    %v676 = vpop.f32.mrb[0].mxu0
    %v677 = vadd.f32 %v448, %v676
    %v678 = vpop.f32.mrb[0].mxu0
    %v679 = vadd.f32 %v450, %v678
    %680 = vmatprep.mubr.f32.mxu0 0.0
    %v681 = vand.u32 %v340, 4294901760
    %682 = vmatmul.mubr.f32.gmra.mrb[0].mxu0 %v681
    %v683 = vpop.f32.mrb[0].mxu0
    %v684 = vadd.f32 %v459, %v683
    %v685 = vpop.f32.mrb[0].mxu0
    %v686 = vadd.f32 %v461, %v685
    %687 = vmatprep.mubr.f32.mxu0 0.0
    %v688 = vand.u32 %v343, 4294901760
    %689 = vmatmul.mubr.f32.gmra.mrb[0].mxu0 %v688
    %v690 = vpop.f32.mrb[0].mxu0
    %v691 = vadd.f32 %v470, %v690
    %v692 = vpop.f32.mrb[0].mxu0
    %v693 = vadd.f32 %v472, %v692
    %694 = vmatprep.mubr.f32.mxu0 0.0
    %v695 = vand.u32 %v346, 4294901760
    %696 = vmatmul.mubr.f32.gmra.mrb[0].mxu0 %v695
    %v697 = vpop.f32.mrb[0].mxu0
    %v698 = vadd.f32 %v481, %v697
    %v699 = vpop.f32.mrb[0].mxu0
    %v700 = vadd.f32 %v483, %v699
    %701 = vmatprep.mubr.f32.mxu0 0.0
    %v702 = vand.u32 %v349, 4294901760
    %703 = vmatmul.mubr.f32.gmra.mrb[0].mxu0 %v702
    %v704 = vpop.f32.mrb[0].mxu0
    %v705 = vadd.f32 %v492, %v704
    %v706 = vpop.f32.mrb[0].mxu0
    %v707 = vadd.f32 %v494, %v706
    %708 = vmatprep.mubr.f32.mxu0 0.0
    %v709 = vand.u32 %v352, 4294901760
    %710 = vmatmul.mubr.f32.gmra.mrb[0].mxu0 %v709
    %v711 = vpop.f32.mrb[0].mxu0
    %v712 = vadd.f32 %v503, %v711
    %v713 = vpop.f32.mrb[0].mxu0
    %v714 = vadd.f32 %v505, %v713
    %715 = vmatprep.mubr.f32.mxu0 0.0
    %v716 = vand.u32 %v355, 4294901760
    %717 = vmatmul.mubr.f32.gmra.mrb[0].mxu0 %v716
    %v718 = vpop.f32.mrb[0].mxu0
    %v719 = vadd.f32 %v514, %v718
    %v720 = vpop.f32.mrb[0].mxu0
    %v721 = vadd.f32 %v516, %v720
    %722 = vmatprep.mubr.f32.mxu0 0.0
    %v723 = vand.u32 %v358, 4294901760
    %724 = vmatmul.mubr.f32.gmra.mrb[0].mxu0 %v723
    %v725 = vpop.f32.mrb[0].mxu0
    %v726 = vadd.f32 %v525, %v725
    %v727 = vpop.f32.mrb[0].mxu0
    %v728 = vadd.f32 %v527, %v727
    %729 = vdwg.mxu0
    %v730 = vand.u32 %v264, 4294901760
    %v731 = vsub.f32 %v264, %v730
    %732 = vmatprep.subr.mxu0 %v731
    %v733 = vand.u32 %v263, 4294901760
    %v734 = vsub.f32 %v263, %v733
    %735 = vmatpush1.msra.mxu0 %v734
    %v736 = vand.u32 %v266, 4294901760
    %v737 = vsub.f32 %v266, %v736
    %738 = vmatprep.subr.mxu0 %v737
    %v739 = vand.u32 %v265, 4294901760
    %v740 = vsub.f32 %v265, %v739
    %741 = vmatpush1.msra.mxu0 %v740
    %v742 = vand.u32 %v268, 4294901760
    %v743 = vsub.f32 %v268, %v742
    %744 = vmatprep.subr.mxu0 %v743
    %v745 = vand.u32 %v267, 4294901760
    %v746 = vsub.f32 %v267, %v745
    %747 = vmatpush1.msra.mxu0 %v746
    %v748 = vand.u32 %v270, 4294901760
    %v749 = vsub.f32 %v270, %v748
    %750 = vmatprep.subr.mxu0 %v749
    %v751 = vand.u32 %v269, 4294901760
    %v752 = vsub.f32 %v269, %v751
    %753 = vmatpush1.msra.mxu0 %v752
    %v754 = vand.u32 %v272, 4294901760
    %v755 = vsub.f32 %v272, %v754
    %756 = vmatprep.subr.mxu0 %v755
    %v757 = vand.u32 %v271, 4294901760
    %v758 = vsub.f32 %v271, %v757
    %759 = vmatpush1.msra.mxu0 %v758
    %v760 = vand.u32 %v274, 4294901760
    %v761 = vsub.f32 %v274, %v760
    %762 = vmatprep.subr.mxu0 %v761
    %v763 = vand.u32 %v273, 4294901760
    %v764 = vsub.f32 %v273, %v763
    %765 = vmatpush1.msra.mxu0 %v764
    %v766 = vand.u32 %v276, 4294901760
    %v767 = vsub.f32 %v276, %v766
    %768 = vmatprep.subr.mxu0 %v767
    %v769 = vand.u32 %v275, 4294901760
    %v770 = vsub.f32 %v275, %v769
    %771 = vmatpush1.msra.mxu0 %v770
    %v772 = vand.u32 %v278, 4294901760
    %v773 = vsub.f32 %v278, %v772
    %774 = vmatprep.subr.mxu0 %v773
    %v775 = vand.u32 %v277, 4294901760
    %v776 = vsub.f32 %v277, %v775
    %777 = vmatpush1.msra.mxu0 %v776
    %778 = vmatprep.subr.mxu0 0.0
    %779 = vmatpush1.msra.mxu0 0.0
    %780 = vmatprep.subr.mxu0 0.0
    %781 = vmatpush1.msra.mxu0 0.0
    %782 = vmatprep.subr.mxu0 0.0
    %783 = vmatpush1.msra.mxu0 0.0
    %784 = vmatprep.subr.mxu0 0.0
    %785 = vmatpush1.msra.mxu0 0.0
    %786 = vmatprep.subr.mxu0 0.0
    %787 = vmatpush1.msra.mxu0 0.0
    %788 = vmatprep.subr.mxu0 0.0
    %789 = vmatpush1.msra.mxu0 0.0
    %790 = vmatprep.subr.mxu0 0.0
    %791 = vmatpush1.msra.mxu0 0.0
    %792 = vmatprep.subr.mxu0 0.0
    %793 = vmatpush1.msra.mxu0 0.0
    %794 = vmatprep.subr.mxu0 0.0
    %795 = vmatpush1.msra.mxu0 0.0
    %796 = vmatprep.subr.mxu0 0.0
    %797 = vmatpush1.msra.mxu0 0.0
    %798 = vmatprep.subr.mxu0 0.0
    %799 = vmatpush1.msra.mxu0 0.0
    %800 = vmatprep.subr.mxu0 0.0
    %801 = vmatpush1.msra.mxu0 0.0
    %802 = vmatprep.subr.mxu0 0.0
    %803 = vmatpush1.msra.mxu0 0.0
    %804 = vmatprep.subr.mxu0 0.0
    %805 = vmatpush1.msra.mxu0 0.0
    %806 = vmatprep.subr.mxu0 0.0
    %807 = vmatpush1.msra.mxu0 0.0
    %808 = vmatprep.subr.mxu0 0.0
    %809 = vmatpush1.msra.mxu0 0.0
    %810 = vmatprep.subr.mxu0 0.0
    %811 = vmatpush1.msra.mxu0 0.0
    %812 = vmatprep.subr.mxu0 0.0
    %813 = vmatpush1.msra.mxu0 0.0
    %814 = vmatprep.subr.mxu0 0.0
    %815 = vmatpush1.msra.mxu0 0.0
    %816 = vmatprep.subr.mxu0 0.0
    %817 = vmatpush1.msra.mxu0 0.0
    %818 = vmatprep.subr.mxu0 0.0
    %819 = vmatpush1.msra.mxu0 0.0
    %820 = vmatprep.subr.mxu0 0.0
    %821 = vmatpush1.msra.mxu0 0.0
    %822 = vmatprep.subr.mxu0 0.0
    %823 = vmatpush1.msra.mxu0 0.0
    %824 = vmatprep.subr.mxu0 0.0
    %825 = vmatpush1.msra.mxu0 0.0
    %826 = vmatprep.mubr.f32.mxu0 0.0
    %v827 = vand.u32 %v337, 4294901760
    %v828 = vsub.f32 %v337, %v827
    %829 = vmatmul.mubr.f32.gmra.mrb[0].mxu0 %v828
    %v830 = vpop.f32.mrb[0].mxu0
    %v831 = vadd.f32 %v677, %v830
    %v832 = vpop.f32.mrb[0].mxu0
    %v833 = vadd.f32 %v679, %v832
    %834 = vmatprep.mubr.f32.mxu0 0.0
    %v835 = vand.u32 %v340, 4294901760
    %v836 = vsub.f32 %v340, %v835
    %837 = vmatmul.mubr.f32.gmra.mrb[0].mxu0 %v836
    %v838 = vpop.f32.mrb[0].mxu0
    %v839 = vadd.f32 %v684, %v838
    %v840 = vpop.f32.mrb[0].mxu0
    %v841 = vadd.f32 %v686, %v840
    %842 = vmatprep.mubr.f32.mxu0 0.0
    %v843 = vand.u32 %v343, 4294901760
    %v844 = vsub.f32 %v343, %v843
    %845 = vmatmul.mubr.f32.gmra.mrb[0].mxu0 %v844
    %v846 = vpop.f32.mrb[0].mxu0
    %v847 = vadd.f32 %v691, %v846
    %v848 = vpop.f32.mrb[0].mxu0
    %v849 = vadd.f32 %v693, %v848
    %850 = vmatprep.mubr.f32.mxu0 0.0
    %v851 = vand.u32 %v346, 4294901760
    %v852 = vsub.f32 %v346, %v851
    %853 = vmatmul.mubr.f32.gmra.mrb[0].mxu0 %v852
    %v854 = vpop.f32.mrb[0].mxu0
    %v855 = vadd.f32 %v698, %v854
    %v856 = vpop.f32.mrb[0].mxu0
    %v857 = vadd.f32 %v700, %v856
    %858 = vmatprep.mubr.f32.mxu0 0.0
    %v859 = vand.u32 %v349, 4294901760
    %v860 = vsub.f32 %v349, %v859
    %861 = vmatmul.mubr.f32.gmra.mrb[0].mxu0 %v860
    %v862 = vpop.f32.mrb[0].mxu0
    %v863 = vadd.f32 %v705, %v862
    %v864 = vpop.f32.mrb[0].mxu0
    %v865 = vadd.f32 %v707, %v864
    %866 = vmatprep.mubr.f32.mxu0 0.0
    %v867 = vand.u32 %v352, 4294901760
    %v868 = vsub.f32 %v352, %v867
    %869 = vmatmul.mubr.f32.gmra.mrb[0].mxu0 %v868
    %v870 = vpop.f32.mrb[0].mxu0
    %v871 = vadd.f32 %v712, %v870
    %v872 = vpop.f32.mrb[0].mxu0
    %v873 = vadd.f32 %v714, %v872
    %874 = vmatprep.mubr.f32.mxu0 0.0
    %v875 = vand.u32 %v355, 4294901760
    %v876 = vsub.f32 %v355, %v875
    %877 = vmatmul.mubr.f32.gmra.mrb[0].mxu0 %v876
    %v878 = vpop.f32.mrb[0].mxu0
    %v879 = vadd.f32 %v719, %v878
    %v880 = vpop.f32.mrb[0].mxu0
    %v881 = vadd.f32 %v721, %v880
    %882 = vmatprep.mubr.f32.mxu0 0.0
    %v883 = vand.u32 %v358, 4294901760
    %v884 = vsub.f32 %v358, %v883
    %885 = vmatmul.mubr.f32.gmra.mrb[0].mxu0 %v884
    %v886 = vpop.f32.mrb[0].mxu0
    %v887 = vadd.f32 %v726, %v886
    %v888 = vpop.f32.mrb[0].mxu0
    %v889 = vadd.f32 %v728, %v888
    %890 = vdwg.mxu0
    %v891 = vand.u32 %v264, 4294901760
    %892 = vmatprep.subr.mxu0 %v891
    %v893 = vand.u32 %v263, 4294901760
    %894 = vmatpush1.msra.mxu0 %v893
    %v895 = vand.u32 %v266, 4294901760
    %896 = vmatprep.subr.mxu0 %v895
    %v897 = vand.u32 %v265, 4294901760
    %898 = vmatpush1.msra.mxu0 %v897
    %v899 = vand.u32 %v268, 4294901760
    %900 = vmatprep.subr.mxu0 %v899
    %v901 = vand.u32 %v267, 4294901760
    %902 = vmatpush1.msra.mxu0 %v901
    %v903 = vand.u32 %v270, 4294901760
    %904 = vmatprep.subr.mxu0 %v903
    %v905 = vand.u32 %v269, 4294901760
    %906 = vmatpush1.msra.mxu0 %v905
    %v907 = vand.u32 %v272, 4294901760
    %908 = vmatprep.subr.mxu0 %v907
    %v909 = vand.u32 %v271, 4294901760
    %910 = vmatpush1.msra.mxu0 %v909
    %v911 = vand.u32 %v274, 4294901760
    %912 = vmatprep.subr.mxu0 %v911
    %v913 = vand.u32 %v273, 4294901760
    %914 = vmatpush1.msra.mxu0 %v913
    %v915 = vand.u32 %v276, 4294901760
    %916 = vmatprep.subr.mxu0 %v915
    %v917 = vand.u32 %v275, 4294901760
    %918 = vmatpush1.msra.mxu0 %v917
    %v919 = vand.u32 %v278, 4294901760
    %920 = vmatprep.subr.mxu0 %v919
    %v921 = vand.u32 %v277, 4294901760
    %922 = vmatpush1.msra.mxu0 %v921
    %923 = vmatprep.subr.mxu0 0.0
    %924 = vmatpush1.msra.mxu0 0.0
    %925 = vmatprep.subr.mxu0 0.0
    %926 = vmatpush1.msra.mxu0 0.0
    %927 = vmatprep.subr.mxu0 0.0
    %928 = vmatpush1.msra.mxu0 0.0
    %929 = vmatprep.subr.mxu0 0.0
    %930 = vmatpush1.msra.mxu0 0.0
    %931 = vmatprep.subr.mxu0 0.0
    %932 = vmatpush1.msra.mxu0 0.0
    %933 = vmatprep.subr.mxu0 0.0
    %934 = vmatpush1.msra.mxu0 0.0
    %935 = vmatprep.subr.mxu0 0.0
    %936 = vmatpush1.msra.mxu0 0.0
    %937 = vmatprep.subr.mxu0 0.0
    %938 = vmatpush1.msra.mxu0 0.0
    %939 = vmatprep.subr.mxu0 0.0
    %940 = vmatpush1.msra.mxu0 0.0
    %941 = vmatprep.subr.mxu0 0.0
    %942 = vmatpush1.msra.mxu0 0.0
    %943 = vmatprep.subr.mxu0 0.0
    %944 = vmatpush1.msra.mxu0 0.0
    %945 = vmatprep.subr.mxu0 0.0
    %946 = vmatpush1.msra.mxu0 0.0
    %947 = vmatprep.subr.mxu0 0.0
    %948 = vmatpush1.msra.mxu0 0.0
    %949 = vmatprep.subr.mxu0 0.0
    %950 = vmatpush1.msra.mxu0 0.0
    %951 = vmatprep.subr.mxu0 0.0
    %952 = vmatpush1.msra.mxu0 0.0
    %953 = vmatprep.subr.mxu0 0.0
    %954 = vmatpush1.msra.mxu0 0.0
    %955 = vmatprep.subr.mxu0 0.0
    %956 = vmatpush1.msra.mxu0 0.0
    %957 = vmatprep.subr.mxu0 0.0
    %958 = vmatpush1.msra.mxu0 0.0
    %959 = vmatprep.subr.mxu0 0.0
    %960 = vmatpush1.msra.mxu0 0.0
    %961 = vmatprep.subr.mxu0 0.0
    %962 = vmatpush1.msra.mxu0 0.0
    %963 = vmatprep.subr.mxu0 0.0
    %964 = vmatpush1.msra.mxu0 0.0
    %965 = vmatprep.subr.mxu0 0.0
    %966 = vmatpush1.msra.mxu0 0.0
    %967 = vmatprep.subr.mxu0 0.0
    %968 = vmatpush1.msra.mxu0 0.0
    %969 = vmatprep.subr.mxu0 0.0
    %970 = vmatpush1.msra.mxu0 0.0
    %971 = vmatprep.mubr.f32.mxu0 0.0
    %v972 = vand.u32 %v337, 4294901760
    %v973 = vsub.f32 %v337, %v972
    %v974 = vand.u32 %v973, 4294901760
    %975 = vmatmul.mubr.f32.gmra.mrb[0].mxu0 %v974
    %v976 = vpop.f32.mrb[0].mxu0
    %v977 = vadd.f32 %v831, %v976
    %v978 = vpop.f32.mrb[0].mxu0
    %v979 = vadd.f32 %v833, %v978
    %980 = vmatprep.mubr.f32.mxu0 0.0
    %v981 = vand.u32 %v340, 4294901760
    %v982 = vsub.f32 %v340, %v981
    %v983 = vand.u32 %v982, 4294901760
    %984 = vmatmul.mubr.f32.gmra.mrb[0].mxu0 %v983
    %v985 = vpop.f32.mrb[0].mxu0
    %v986 = vadd.f32 %v839, %v985
    %v987 = vpop.f32.mrb[0].mxu0
    %v988 = vadd.f32 %v841, %v987
    %989 = vmatprep.mubr.f32.mxu0 0.0
    %v990 = vand.u32 %v343, 4294901760
    %v991 = vsub.f32 %v343, %v990
    %v992 = vand.u32 %v991, 4294901760
    %993 = vmatmul.mubr.f32.gmra.mrb[0].mxu0 %v992
    %v994 = vpop.f32.mrb[0].mxu0
    %v995 = vadd.f32 %v847, %v994
    %v996 = vpop.f32.mrb[0].mxu0
    %v997 = vadd.f32 %v849, %v996
    %998 = vmatprep.mubr.f32.mxu0 0.0
    %v999 = vand.u32 %v346, 4294901760
    %v1000 = vsub.f32 %v346, %v999
    %v1001 = vand.u32 %v1000, 4294901760
    %1002 = vmatmul.mubr.f32.gmra.mrb[0].mxu0 %v1001
    %v1003 = vpop.f32.mrb[0].mxu0
    %v1004 = vadd.f32 %v855, %v1003
    %v1005 = vpop.f32.mrb[0].mxu0
    %v1006 = vadd.f32 %v857, %v1005
    %1007 = vmatprep.mubr.f32.mxu0 0.0
    %v1008 = vand.u32 %v349, 4294901760
    %v1009 = vsub.f32 %v349, %v1008
    %v1010 = vand.u32 %v1009, 4294901760
    %1011 = vmatmul.mubr.f32.gmra.mrb[0].mxu0 %v1010
    %v1012 = vpop.f32.mrb[0].mxu0
    %v1013 = vadd.f32 %v863, %v1012
    %v1014 = vpop.f32.mrb[0].mxu0
    %v1015 = vadd.f32 %v865, %v1014
    %1016 = vmatprep.mubr.f32.mxu0 0.0
    %v1017 = vand.u32 %v352, 4294901760
    %v1018 = vsub.f32 %v352, %v1017
    %v1019 = vand.u32 %v1018, 4294901760
    %1020 = vmatmul.mubr.f32.gmra.mrb[0].mxu0 %v1019
    %v1021 = vpop.f32.mrb[0].mxu0
    %v1022 = vadd.f32 %v871, %v1021
    %v1023 = vpop.f32.mrb[0].mxu0
    %v1024 = vadd.f32 %v873, %v1023
    %1025 = vmatprep.mubr.f32.mxu0 0.0
    %v1026 = vand.u32 %v355, 4294901760
    %v1027 = vsub.f32 %v355, %v1026
    %v1028 = vand.u32 %v1027, 4294901760
    %1029 = vmatmul.mubr.f32.gmra.mrb[0].mxu0 %v1028
    %v1030 = vpop.f32.mrb[0].mxu0
    %v1031 = vadd.f32 %v879, %v1030
    %v1032 = vpop.f32.mrb[0].mxu0
    %v1033 = vadd.f32 %v881, %v1032
    %1034 = vmatprep.mubr.f32.mxu0 0.0
    %v1035 = vand.u32 %v358, 4294901760
    %v1036 = vsub.f32 %v358, %v1035
    %v1037 = vand.u32 %v1036, 4294901760
    %1038 = vmatmul.mubr.f32.gmra.mrb[0].mxu0 %v1037
    %v1039 = vpop.f32.mrb[0].mxu0
    %v1040 = vadd.f32 %v887, %v1039
    %v1041 = vpop.f32.mrb[0].mxu0
    %v1042 = vadd.f32 %v889, %v1041
    %1043 = vdwg.mxu0
    %v1044 = vand.u32 %v264, 4294901760
    %v1045 = vsub.f32 %v264, %v1044
    %v1046 = vand.u32 %v1045, 4294901760
    %1047 = vmatprep.subr.mxu0 %v1046
    %v1048 = vand.u32 %v263, 4294901760
    %v1049 = vsub.f32 %v263, %v1048
    %v1050 = vand.u32 %v1049, 4294901760
    %1051 = vmatpush1.msra.mxu0 %v1050
    %v1052 = vand.u32 %v266, 4294901760
    %v1053 = vsub.f32 %v266, %v1052
    %v1054 = vand.u32 %v1053, 4294901760
    %1055 = vmatprep.subr.mxu0 %v1054
    %v1056 = vand.u32 %v265, 4294901760
    %v1057 = vsub.f32 %v265, %v1056
    %v1058 = vand.u32 %v1057, 4294901760
    %1059 = vmatpush1.msra.mxu0 %v1058
    %v1060 = vand.u32 %v268, 4294901760
    %v1061 = vsub.f32 %v268, %v1060
    %v1062 = vand.u32 %v1061, 4294901760
    %1063 = vmatprep.subr.mxu0 %v1062
    %v1064 = vand.u32 %v267, 4294901760
    %v1065 = vsub.f32 %v267, %v1064
    %v1066 = vand.u32 %v1065, 4294901760
    %1067 = vmatpush1.msra.mxu0 %v1066
    %v1068 = vand.u32 %v270, 4294901760
    %v1069 = vsub.f32 %v270, %v1068
    %v1070 = vand.u32 %v1069, 4294901760
    %1071 = vmatprep.subr.mxu0 %v1070
    %v1072 = vand.u32 %v269, 4294901760
    %v1073 = vsub.f32 %v269, %v1072
    %v1074 = vand.u32 %v1073, 4294901760
    %1075 = vmatpush1.msra.mxu0 %v1074
    %v1076 = vand.u32 %v272, 4294901760
    %v1077 = vsub.f32 %v272, %v1076
    %v1078 = vand.u32 %v1077, 4294901760
    %1079 = vmatprep.subr.mxu0 %v1078
    %v1080 = vand.u32 %v271, 4294901760
    %v1081 = vsub.f32 %v271, %v1080
    %v1082 = vand.u32 %v1081, 4294901760
    %1083 = vmatpush1.msra.mxu0 %v1082
    %v1084 = vand.u32 %v274, 4294901760
    %v1085 = vsub.f32 %v274, %v1084
    %v1086 = vand.u32 %v1085, 4294901760
    %1087 = vmatprep.subr.mxu0 %v1086
    %v1088 = vand.u32 %v273, 4294901760
    %v1089 = vsub.f32 %v273, %v1088
    %v1090 = vand.u32 %v1089, 4294901760
    %1091 = vmatpush1.msra.mxu0 %v1090
    %v1092 = vand.u32 %v276, 4294901760
    %v1093 = vsub.f32 %v276, %v1092
    %v1094 = vand.u32 %v1093, 4294901760
    %1095 = vmatprep.subr.mxu0 %v1094
    %v1096 = vand.u32 %v275, 4294901760
    %v1097 = vsub.f32 %v275, %v1096
    %v1098 = vand.u32 %v1097, 4294901760
    %1099 = vmatpush1.msra.mxu0 %v1098
    %v1100 = vand.u32 %v278, 4294901760
    %v1101 = vsub.f32 %v278, %v1100
    %v1102 = vand.u32 %v1101, 4294901760
    %1103 = vmatprep.subr.mxu0 %v1102
    %v1104 = vand.u32 %v277, 4294901760
    %v1105 = vsub.f32 %v277, %v1104
    %v1106 = vand.u32 %v1105, 4294901760
    %1107 = vmatpush1.msra.mxu0 %v1106
    %1108 = vmatprep.subr.mxu0 0.0
    %1109 = vmatpush1.msra.mxu0 0.0
    %1110 = vmatprep.subr.mxu0 0.0
    %1111 = vmatpush1.msra.mxu0 0.0
    %1112 = vmatprep.subr.mxu0 0.0
    %1113 = vmatpush1.msra.mxu0 0.0
    %1114 = vmatprep.subr.mxu0 0.0
    %1115 = vmatpush1.msra.mxu0 0.0
    %1116 = vmatprep.subr.mxu0 0.0
    %1117 = vmatpush1.msra.mxu0 0.0
    %1118 = vmatprep.subr.mxu0 0.0
    %1119 = vmatpush1.msra.mxu0 0.0
    %1120 = vmatprep.subr.mxu0 0.0
    %1121 = vmatpush1.msra.mxu0 0.0
    %1122 = vmatprep.subr.mxu0 0.0
    %1123 = vmatpush1.msra.mxu0 0.0
    %1124 = vmatprep.subr.mxu0 0.0
    %1125 = vmatpush1.msra.mxu0 0.0
    %1126 = vmatprep.subr.mxu0 0.0
    %1127 = vmatpush1.msra.mxu0 0.0
    %1128 = vmatprep.subr.mxu0 0.0
    %1129 = vmatpush1.msra.mxu0 0.0
    %1130 = vmatprep.subr.mxu0 0.0
    %1131 = vmatpush1.msra.mxu0 0.0
    %1132 = vmatprep.subr.mxu0 0.0
    %1133 = vmatpush1.msra.mxu0 0.0
    %1134 = vmatprep.subr.mxu0 0.0
    %1135 = vmatpush1.msra.mxu0 0.0
    %1136 = vmatprep.subr.mxu0 0.0
    %1137 = vmatpush1.msra.mxu0 0.0
    %1138 = vmatprep.subr.mxu0 0.0
    %1139 = vmatpush1.msra.mxu0 0.0
    %1140 = vmatprep.subr.mxu0 0.0
    %1141 = vmatpush1.msra.mxu0 0.0
    %1142 = vmatprep.subr.mxu0 0.0
    %1143 = vmatpush1.msra.mxu0 0.0
    %1144 = vmatprep.subr.mxu0 0.0
    %1145 = vmatpush1.msra.mxu0 0.0
    %1146 = vmatprep.subr.mxu0 0.0
    %1147 = vmatpush1.msra.mxu0 0.0
    %1148 = vmatprep.subr.mxu0 0.0
    %1149 = vmatpush1.msra.mxu0 0.0
    %1150 = vmatprep.subr.mxu0 0.0
    %1151 = vmatpush1.msra.mxu0 0.0
    %1152 = vmatprep.subr.mxu0 0.0
    %1153 = vmatpush1.msra.mxu0 0.0
    %1154 = vmatprep.subr.mxu0 0.0
    %1155 = vmatpush1.msra.mxu0 0.0
    %1156 = vmatprep.mubr.f32.mxu0 0.0
    %v1157 = vand.u32 %v337, 4294901760
    %1158 = vmatmul.mubr.f32.gmra.mrb[0].mxu0 %v1157
    %v1159 = vpop.f32.mrb[0].mxu0
    %v1160 = vadd.f32 %v977, %v1159
    %v1161 = vpop.f32.mrb[0].mxu0
    %v1162 = vadd.f32 %v979, %v1161
    %1163 = vmatprep.mubr.f32.mxu0 0.0
    %v1164 = vand.u32 %v340, 4294901760
    %1165 = vmatmul.mubr.f32.gmra.mrb[0].mxu0 %v1164
    %v1166 = vpop.f32.mrb[0].mxu0
    %v1167 = vadd.f32 %v986, %v1166
    %v1168 = vpop.f32.mrb[0].mxu0
    %v1169 = vadd.f32 %v988, %v1168
    %1170 = vmatprep.mubr.f32.mxu0 0.0
    %v1171 = vand.u32 %v343, 4294901760
    %1172 = vmatmul.mubr.f32.gmra.mrb[0].mxu0 %v1171
    %v1173 = vpop.f32.mrb[0].mxu0
    %v1174 = vadd.f32 %v995, %v1173
    %v1175 = vpop.f32.mrb[0].mxu0
    %v1176 = vadd.f32 %v997, %v1175
    %1177 = vmatprep.mubr.f32.mxu0 0.0
    %v1178 = vand.u32 %v346, 4294901760
    %1179 = vmatmul.mubr.f32.gmra.mrb[0].mxu0 %v1178
    %v1180 = vpop.f32.mrb[0].mxu0
    %v1181 = vadd.f32 %v1004, %v1180
    %v1182 = vpop.f32.mrb[0].mxu0
    %v1183 = vadd.f32 %v1006, %v1182
    %1184 = vmatprep.mubr.f32.mxu0 0.0
    %v1185 = vand.u32 %v349, 4294901760
    %1186 = vmatmul.mubr.f32.gmra.mrb[0].mxu0 %v1185
    %v1187 = vpop.f32.mrb[0].mxu0
    %v1188 = vadd.f32 %v1013, %v1187
    %v1189 = vpop.f32.mrb[0].mxu0
    %v1190 = vadd.f32 %v1015, %v1189
    %1191 = vmatprep.mubr.f32.mxu0 0.0
    %v1192 = vand.u32 %v352, 4294901760
    %1193 = vmatmul.mubr.f32.gmra.mrb[0].mxu0 %v1192
    %v1194 = vpop.f32.mrb[0].mxu0
    %v1195 = vadd.f32 %v1022, %v1194
    %v1196 = vpop.f32.mrb[0].mxu0
    %v1197 = vadd.f32 %v1024, %v1196
    %1198 = vmatprep.mubr.f32.mxu0 0.0
    %v1199 = vand.u32 %v355, 4294901760
    %1200 = vmatmul.mubr.f32.gmra.mrb[0].mxu0 %v1199
    %v1201 = vpop.f32.mrb[0].mxu0
    %v1202 = vadd.f32 %v1031, %v1201
    %v1203 = vpop.f32.mrb[0].mxu0
    %v1204 = vadd.f32 %v1033, %v1203
    %1205 = vmatprep.mubr.f32.mxu0 0.0
    %v1206 = vand.u32 %v358, 4294901760
    %1207 = vmatmul.mubr.f32.gmra.mrb[0].mxu0 %v1206
    %v1208 = vpop.f32.mrb[0].mxu0
    %v1209 = vadd.f32 %v1040, %v1208
    %v1210 = vpop.f32.mrb[0].mxu0
    %v1211 = vadd.f32 %v1042, %v1210
    %1212 = vdwg.mxu0
    %v1213 = vand.u32 %v264, 4294901760
    %1214 = vmatprep.subr.mxu0 %v1213
    %v1215 = vand.u32 %v263, 4294901760
    %1216 = vmatpush1.msra.mxu0 %v1215
    %v1217 = vand.u32 %v266, 4294901760
    %1218 = vmatprep.subr.mxu0 %v1217
    %v1219 = vand.u32 %v265, 4294901760
    %1220 = vmatpush1.msra.mxu0 %v1219
    %v1221 = vand.u32 %v268, 4294901760
    %1222 = vmatprep.subr.mxu0 %v1221
    %v1223 = vand.u32 %v267, 4294901760
    %1224 = vmatpush1.msra.mxu0 %v1223
    %v1225 = vand.u32 %v270, 4294901760
    %1226 = vmatprep.subr.mxu0 %v1225
    %v1227 = vand.u32 %v269, 4294901760
    %1228 = vmatpush1.msra.mxu0 %v1227
    %v1229 = vand.u32 %v272, 4294901760
    %1230 = vmatprep.subr.mxu0 %v1229
    %v1231 = vand.u32 %v271, 4294901760
    %1232 = vmatpush1.msra.mxu0 %v1231
    %v1233 = vand.u32 %v274, 4294901760
    %1234 = vmatprep.subr.mxu0 %v1233
    %v1235 = vand.u32 %v273, 4294901760
    %1236 = vmatpush1.msra.mxu0 %v1235
    %v1237 = vand.u32 %v276, 4294901760
    %1238 = vmatprep.subr.mxu0 %v1237
    %v1239 = vand.u32 %v275, 4294901760
    %1240 = vmatpush1.msra.mxu0 %v1239
    %v1241 = vand.u32 %v278, 4294901760
    %1242 = vmatprep.subr.mxu0 %v1241
    %v1243 = vand.u32 %v277, 4294901760
    %1244 = vmatpush1.msra.mxu0 %v1243
    %1245 = vmatprep.subr.mxu0 0.0
    %1246 = vmatpush1.msra.mxu0 0.0
    %1247 = vmatprep.subr.mxu0 0.0
    %1248 = vmatpush1.msra.mxu0 0.0
    %1249 = vmatprep.subr.mxu0 0.0
    %1250 = vmatpush1.msra.mxu0 0.0
    %1251 = vmatprep.subr.mxu0 0.0
    %1252 = vmatpush1.msra.mxu0 0.0
    %1253 = vmatprep.subr.mxu0 0.0
    %1254 = vmatpush1.msra.mxu0 0.0
    %1255 = vmatprep.subr.mxu0 0.0
    %1256 = vmatpush1.msra.mxu0 0.0
    %1257 = vmatprep.subr.mxu0 0.0
    %1258 = vmatpush1.msra.mxu0 0.0
    %1259 = vmatprep.subr.mxu0 0.0
    %1260 = vmatpush1.msra.mxu0 0.0
    %1261 = vmatprep.subr.mxu0 0.0
    %1262 = vmatpush1.msra.mxu0 0.0
    %1263 = vmatprep.subr.mxu0 0.0
    %1264 = vmatpush1.msra.mxu0 0.0
    %1265 = vmatprep.subr.mxu0 0.0
    %1266 = vmatpush1.msra.mxu0 0.0
    %1267 = vmatprep.subr.mxu0 0.0
    %1268 = vmatpush1.msra.mxu0 0.0
    %1269 = vmatprep.subr.mxu0 0.0
    %1270 = vmatpush1.msra.mxu0 0.0
    %1271 = vmatprep.subr.mxu0 0.0
    %1272 = vmatpush1.msra.mxu0 0.0
    %1273 = vmatprep.subr.mxu0 0.0
    %1274 = vmatpush1.msra.mxu0 0.0
    %1275 = vmatprep.subr.mxu0 0.0
    %1276 = vmatpush1.msra.mxu0 0.0
    %1277 = vmatprep.subr.mxu0 0.0
    %1278 = vmatpush1.msra.mxu0 0.0
    %1279 = vmatprep.subr.mxu0 0.0
    %1280 = vmatpush1.msra.mxu0 0.0
    %1281 = vmatprep.subr.mxu0 0.0
    %1282 = vmatpush1.msra.mxu0 0.0
    %1283 = vmatprep.subr.mxu0 0.0
    %1284 = vmatpush1.msra.mxu0 0.0
    %1285 = vmatprep.subr.mxu0 0.0
    %1286 = vmatpush1.msra.mxu0 0.0
    %1287 = vmatprep.subr.mxu0 0.0
    %1288 = vmatpush1.msra.mxu0 0.0
    %1289 = vmatprep.subr.mxu0 0.0
    %1290 = vmatpush1.msra.mxu0 0.0
    %1291 = vmatprep.subr.mxu0 0.0
    %1292 = vmatpush1.msra.mxu0 0.0
    %1293 = vmatprep.mubr.f32.mxu0 0.0
    %v1294 = vand.u32 %v337, 4294901760
    %1295 = vmatmul.mubr.f32.gmra.mrb[0].mxu0 %v1294
    %v1296 = vpop.f32.mrb[0].mxu0
    %v1297 = vadd.f32 %v1160, %v1296
    %v1298 = vpop.f32.mrb[0].mxu0
    %v1299 = vadd.f32 %v1162, %v1298
    %1300 = vmatprep.mubr.f32.mxu0 0.0
    %v1301 = vand.u32 %v340, 4294901760
    %1302 = vmatmul.mubr.f32.gmra.mrb[0].mxu0 %v1301
    %v1303 = vpop.f32.mrb[0].mxu0
    %v1304 = vadd.f32 %v1167, %v1303
    %v1305 = vpop.f32.mrb[0].mxu0
    %v1306 = vadd.f32 %v1169, %v1305
    %1307 = vmatprep.mubr.f32.mxu0 0.0
    %v1308 = vand.u32 %v343, 4294901760
    %1309 = vmatmul.mubr.f32.gmra.mrb[0].mxu0 %v1308
    %v1310 = vpop.f32.mrb[0].mxu0
    %v1311 = vadd.f32 %v1174, %v1310
    %v1312 = vpop.f32.mrb[0].mxu0
    %v1313 = vadd.f32 %v1176, %v1312
    %1314 = vmatprep.mubr.f32.mxu0 0.0
    %v1315 = vand.u32 %v346, 4294901760
    %1316 = vmatmul.mubr.f32.gmra.mrb[0].mxu0 %v1315
    %v1317 = vpop.f32.mrb[0].mxu0
    %v1318 = vadd.f32 %v1181, %v1317
    %v1319 = vpop.f32.mrb[0].mxu0
    %v1320 = vadd.f32 %v1183, %v1319
    %1321 = vmatprep.mubr.f32.mxu0 0.0
    %v1322 = vand.u32 %v349, 4294901760
    %1323 = vmatmul.mubr.f32.gmra.mrb[0].mxu0 %v1322
    %v1324 = vpop.f32.mrb[0].mxu0
    %v1325 = vadd.f32 %v1188, %v1324
    %v1326 = vpop.f32.mrb[0].mxu0
    %v1327 = vadd.f32 %v1190, %v1326
    %1328 = vmatprep.mubr.f32.mxu0 0.0
    %v1329 = vand.u32 %v352, 4294901760
    %1330 = vmatmul.mubr.f32.gmra.mrb[0].mxu0 %v1329
    %v1331 = vpop.f32.mrb[0].mxu0
    %v1332 = vadd.f32 %v1195, %v1331
    %v1333 = vpop.f32.mrb[0].mxu0
    %v1334 = vadd.f32 %v1197, %v1333
    %1335 = vmatprep.mubr.f32.mxu0 0.0
    %v1336 = vand.u32 %v355, 4294901760
    %1337 = vmatmul.mubr.f32.gmra.mrb[0].mxu0 %v1336
    %v1338 = vpop.f32.mrb[0].mxu0
    %v1339 = vadd.f32 %v1202, %v1338
    %v1340 = vpop.f32.mrb[0].mxu0
    %v1341 = vadd.f32 %v1204, %v1340
    %1342 = vmatprep.mubr.f32.mxu0 0.0
    %v1343 = vand.u32 %v358, 4294901760
    %1344 = vmatmul.mubr.f32.gmra.mrb[0].mxu0 %v1343
    %v1345 = vpop.f32.mrb[0].mxu0
    %v1346 = vadd.f32 %v1209, %v1345
    %v1347 = vpop.f32.mrb[0].mxu0
    %v1348 = vadd.f32 %v1211, %v1347
    %1349 = vdwg.mxu0
    %v1350 = vtanh.pop %v1297
    %v1351 = vtanh.pop %v1299
    %v1352 = vtanh.pop %v1304
    %v1353 = vtanh.pop %v1306
    %v1354 = vtanh.pop %v1311
    %v1355 = vtanh.pop %v1313
    %v1356 = vtanh.pop %v1318
    %v1357 = vtanh.pop %v1320
    %v1358 = vtanh.pop %v1325
    %v1359 = vtanh.pop %v1327
    %v1360 = vtanh.pop %v1332
    %v1361 = vtanh.pop %v1334
    %v1362 = vtanh.pop %v1339
    %v1363 = vtanh.pop %v1341
    %v1364 = vtanh.pop %v1346
    %v1365 = vtanh.pop %v1348
    %v1366 = vld [vmem:[%s5] sm:$0xff]
    %v1367 = vld [vmem:[%s5 + $0x8] sm:$0xff]
    %v1368 = vld [vmem:[%s5 + $0x10] sm:$0xff]
    %v1369 = vld [vmem:[%s5 + $0x18] sm:$0xff]
    %v1370 = vld [vmem:[%s5 + $0x20] sm:$0xff]
    %v1371 = vld [vmem:[%s5 + $0x28] sm:$0xff]
    %v1372 = vld [vmem:[%s5 + $0x30] sm:$0xff]
    %v1373 = vld [vmem:[%s5 + $0x38] sm:$0xff]
    %v1374 = vld [vmem:[%s6] sm:$0xff]
    %v1375 = vld [vmem:[%s6 + $0x8] sm:$0xff]
    %v1376 = vld [vmem:[%s6 + $0x10] sm:$0xff]
    %v1377 = vld [vmem:[%s6 + $0x18] sm:$0xff]
    %v1378 = vld [vmem:[%s6 + $0x20] sm:$0xff]
    %v1379 = vld [vmem:[%s6 + $0x28] sm:$0xff]
    %v1380 = vld [vmem:[%s6 + $0x30] sm:$0xff]
    %v1381 = vld [vmem:[%s6 + $0x38] sm:$0xff]
    %1383 = vset.pattern.permute.xlu0 0
    %1384 = vperm.xlu0 %1383, %v1374
    %v1385 = vpop.permute.xlu0 %1384
    %1388 = vset.pattern.permute.xlu0 0
    %1389 = vperm.xlu0 %1388, %v1375
    %v1390 = vpop.permute.xlu0 %1389
    %1393 = vset.pattern.permute.xlu0 0
    %1394 = vperm.xlu0 %1393, %v1376
    %v1395 = vpop.permute.xlu0 %1394
    %1398 = vset.pattern.permute.xlu0 0
    %1399 = vperm.xlu0 %1398, %v1377
    %v1400 = vpop.permute.xlu0 %1399
    %1403 = vset.pattern.permute.xlu0 0
    %1404 = vperm.xlu0 %1403, %v1378
    %v1405 = vpop.permute.xlu0 %1404
    %1408 = vset.pattern.permute.xlu0 0
    %1409 = vperm.xlu0 %1408, %v1379
    %v1410 = vpop.permute.xlu0 %1409
    %1413 = vset.pattern.permute.xlu0 0
    %1414 = vperm.xlu0 %1413, %v1380
    %v1415 = vpop.permute.xlu0 %1414
    %1418 = vset.pattern.permute.xlu0 0
    %1419 = vperm.xlu0 %1418, %v1381
    %v1420 = vpop.permute.xlu0 %1419
    %v1423 = vsel %vm335, %v1366, 0
    %v1426 = vsel %vm335, %v1367, 0
    %v1429 = vsel %vm335, %v1368, 0
    %v1432 = vsel %vm335, %v1369, 0
    %v1435 = vsel %vm335, %v1370, 0
    %v1438 = vsel %vm335, %v1371, 0
    %v1441 = vsel %vm335, %v1372, 0
    %v1444 = vsel %vm335, %v1373, 0
    %v1446 = vand.u32 %v1351, 4294901760
    %1447 = vmatprep.subr.mxu0 %v1446
    %v1448 = vand.u32 %v1350, 4294901760
    %1449 = vmatpush1.msra.mxu0 %v1448
    %v1450 = vand.u32 %v1353, 4294901760
    %1451 = vmatprep.subr.mxu0 %v1450
    %v1452 = vand.u32 %v1352, 4294901760
    %1453 = vmatpush1.msra.mxu0 %v1452
    %v1454 = vand.u32 %v1355, 4294901760
    %1455 = vmatprep.subr.mxu0 %v1454
    %v1456 = vand.u32 %v1354, 4294901760
    %1457 = vmatpush1.msra.mxu0 %v1456
    %v1458 = vand.u32 %v1357, 4294901760
    %1459 = vmatprep.subr.mxu0 %v1458
    %v1460 = vand.u32 %v1356, 4294901760
    %1461 = vmatpush1.msra.mxu0 %v1460
    %v1462 = vand.u32 %v1359, 4294901760
    %1463 = vmatprep.subr.mxu0 %v1462
    %v1464 = vand.u32 %v1358, 4294901760
    %1465 = vmatpush1.msra.mxu0 %v1464
    %v1466 = vand.u32 %v1361, 4294901760
    %1467 = vmatprep.subr.mxu0 %v1466
    %v1468 = vand.u32 %v1360, 4294901760
    %1469 = vmatpush1.msra.mxu0 %v1468
    %v1470 = vand.u32 %v1363, 4294901760
    %1471 = vmatprep.subr.mxu0 %v1470
    %v1472 = vand.u32 %v1362, 4294901760
    %1473 = vmatpush1.msra.mxu0 %v1472
    %v1474 = vand.u32 %v1365, 4294901760
    %1475 = vmatprep.subr.mxu0 %v1474
    %v1476 = vand.u32 %v1364, 4294901760
    %1477 = vmatpush1.msra.mxu0 %v1476
    %1478 = vmatprep.subr.mxu0 0.0
    %1479 = vmatpush1.msra.mxu0 0.0
    %1480 = vmatprep.subr.mxu0 0.0
    %1481 = vmatpush1.msra.mxu0 0.0
    %1482 = vmatprep.subr.mxu0 0.0
    %1483 = vmatpush1.msra.mxu0 0.0
    %1484 = vmatprep.subr.mxu0 0.0
    %1485 = vmatpush1.msra.mxu0 0.0
    %1486 = vmatprep.subr.mxu0 0.0
    %1487 = vmatpush1.msra.mxu0 0.0
    %1488 = vmatprep.subr.mxu0 0.0
    %1489 = vmatpush1.msra.mxu0 0.0
    %1490 = vmatprep.subr.mxu0 0.0
    %1491 = vmatpush1.msra.mxu0 0.0
    %1492 = vmatprep.subr.mxu0 0.0
    %1493 = vmatpush1.msra.mxu0 0.0
    %1494 = vmatprep.subr.mxu0 0.0
    %1495 = vmatpush1.msra.mxu0 0.0
    %1496 = vmatprep.subr.mxu0 0.0
    %1497 = vmatpush1.msra.mxu0 0.0
    %1498 = vmatprep.subr.mxu0 0.0
    %1499 = vmatpush1.msra.mxu0 0.0
    %1500 = vmatprep.subr.mxu0 0.0
    %1501 = vmatpush1.msra.mxu0 0.0
    %1502 = vmatprep.subr.mxu0 0.0
    %1503 = vmatpush1.msra.mxu0 0.0
    %1504 = vmatprep.subr.mxu0 0.0
    %1505 = vmatpush1.msra.mxu0 0.0
    %1506 = vmatprep.subr.mxu0 0.0
    %1507 = vmatpush1.msra.mxu0 0.0
    %1508 = vmatprep.subr.mxu0 0.0
    %1509 = vmatpush1.msra.mxu0 0.0
    %1510 = vmatprep.subr.mxu0 0.0
    %1511 = vmatpush1.msra.mxu0 0.0
    %1512 = vmatprep.subr.mxu0 0.0
    %1513 = vmatpush1.msra.mxu0 0.0
    %1514 = vmatprep.subr.mxu0 0.0
    %1515 = vmatpush1.msra.mxu0 0.0
    %1516 = vmatprep.subr.mxu0 0.0
    %1517 = vmatpush1.msra.mxu0 0.0
    %1518 = vmatprep.subr.mxu0 0.0
    %1519 = vmatpush1.msra.mxu0 0.0
    %1520 = vmatprep.subr.mxu0 0.0
    %1521 = vmatpush1.msra.mxu0 0.0
    %1522 = vmatprep.subr.mxu0 0.0
    %1523 = vmatpush1.msra.mxu0 0.0
    %1524 = vmatprep.subr.mxu0 0.0
    %1525 = vmatpush1.msra.mxu0 0.0
    %1526 = vmatprep.mubr.f32.mxu0 0.0
    %v1527 = vand.u32 %v1423, 4294901760
    %v1528 = vsub.f32 %v1423, %v1527
    %v1529 = vand.u32 %v1528, 4294901760
    %v1530 = vsub.f32 %v1528, %v1529
    %v1531 = vand.u32 %v1530, 4294901760
    %1532 = vmatmul.mubr.f32.gmra.mrb[0].mxu0 %v1531
    %v1533 = vpop.f32.mrb[0].mxu0
    %v1534 = vadd.f32 %v1385, %v1533
    %v1535 = vpop.f32.mrb[0].mxu0
    %v1536 = vadd.f32 %v1385, %v1535
    %1537 = vmatprep.mubr.f32.mxu0 0.0
    %v1538 = vand.u32 %v1426, 4294901760
    %v1539 = vsub.f32 %v1426, %v1538
    %v1540 = vand.u32 %v1539, 4294901760
    %v1541 = vsub.f32 %v1539, %v1540
    %v1542 = vand.u32 %v1541, 4294901760
    %1543 = vmatmul.mubr.f32.gmra.mrb[0].mxu0 %v1542
    %v1544 = vpop.f32.mrb[0].mxu0
    %v1545 = vadd.f32 %v1390, %v1544
    %v1546 = vpop.f32.mrb[0].mxu0
    %v1547 = vadd.f32 %v1390, %v1546
    %1548 = vmatprep.mubr.f32.mxu0 0.0
    %v1549 = vand.u32 %v1429, 4294901760
    %v1550 = vsub.f32 %v1429, %v1549
    %v1551 = vand.u32 %v1550, 4294901760
    %v1552 = vsub.f32 %v1550, %v1551
    %v1553 = vand.u32 %v1552, 4294901760
    %1554 = vmatmul.mubr.f32.gmra.mrb[0].mxu0 %v1553
    %v1555 = vpop.f32.mrb[0].mxu0
    %v1556 = vadd.f32 %v1395, %v1555
    %v1557 = vpop.f32.mrb[0].mxu0
    %v1558 = vadd.f32 %v1395, %v1557
    %1559 = vmatprep.mubr.f32.mxu0 0.0
    %v1560 = vand.u32 %v1432, 4294901760
    %v1561 = vsub.f32 %v1432, %v1560
    %v1562 = vand.u32 %v1561, 4294901760
    %v1563 = vsub.f32 %v1561, %v1562
    %v1564 = vand.u32 %v1563, 4294901760
    %1565 = vmatmul.mubr.f32.gmra.mrb[0].mxu0 %v1564
    %v1566 = vpop.f32.mrb[0].mxu0
    %v1567 = vadd.f32 %v1400, %v1566
    %v1568 = vpop.f32.mrb[0].mxu0
    %v1569 = vadd.f32 %v1400, %v1568
    %1570 = vmatprep.mubr.f32.mxu0 0.0
    %v1571 = vand.u32 %v1435, 4294901760
    %v1572 = vsub.f32 %v1435, %v1571
    %v1573 = vand.u32 %v1572, 4294901760
    %v1574 = vsub.f32 %v1572, %v1573
    %v1575 = vand.u32 %v1574, 4294901760
    %1576 = vmatmul.mubr.f32.gmra.mrb[0].mxu0 %v1575
    %v1577 = vpop.f32.mrb[0].mxu0
    %v1578 = vadd.f32 %v1405, %v1577
    %v1579 = vpop.f32.mrb[0].mxu0
    %v1580 = vadd.f32 %v1405, %v1579
    %1581 = vmatprep.mubr.f32.mxu0 0.0
    %v1582 = vand.u32 %v1438, 4294901760
    %v1583 = vsub.f32 %v1438, %v1582
    %v1584 = vand.u32 %v1583, 4294901760
    %v1585 = vsub.f32 %v1583, %v1584
    %v1586 = vand.u32 %v1585, 4294901760
    %1587 = vmatmul.mubr.f32.gmra.mrb[0].mxu0 %v1586
    %v1588 = vpop.f32.mrb[0].mxu0
    %v1589 = vadd.f32 %v1410, %v1588
    %v1590 = vpop.f32.mrb[0].mxu0
    %v1591 = vadd.f32 %v1410, %v1590
    %1592 = vmatprep.mubr.f32.mxu0 0.0
    %v1593 = vand.u32 %v1441, 4294901760
    %v1594 = vsub.f32 %v1441, %v1593
    %v1595 = vand.u32 %v1594, 4294901760
    %v1596 = vsub.f32 %v1594, %v1595
    %v1597 = vand.u32 %v1596, 4294901760
    %1598 = vmatmul.mubr.f32.gmra.mrb[0].mxu0 %v1597
    %v1599 = vpop.f32.mrb[0].mxu0
    %v1600 = vadd.f32 %v1415, %v1599
    %v1601 = vpop.f32.mrb[0].mxu0
    %v1602 = vadd.f32 %v1415, %v1601
    %1603 = vmatprep.mubr.f32.mxu0 0.0
    %v1604 = vand.u32 %v1444, 4294901760
    %v1605 = vsub.f32 %v1444, %v1604
    %v1606 = vand.u32 %v1605, 4294901760
    %v1607 = vsub.f32 %v1605, %v1606
    %v1608 = vand.u32 %v1607, 4294901760
    %1609 = vmatmul.mubr.f32.gmra.mrb[0].mxu0 %v1608
    %v1610 = vpop.f32.mrb[0].mxu0
    %v1611 = vadd.f32 %v1420, %v1610
    %v1612 = vpop.f32.mrb[0].mxu0
    %v1613 = vadd.f32 %v1420, %v1612
    %1614 = vdwg.mxu0
    %v1615 = vand.u32 %v1351, 4294901760
    %v1616 = vsub.f32 %v1351, %v1615
    %v1617 = vand.u32 %v1616, 4294901760
    %v1618 = vsub.f32 %v1616, %v1617
    %v1619 = vand.u32 %v1618, 4294901760
    %1620 = vmatprep.subr.mxu0 %v1619
    %v1621 = vand.u32 %v1350, 4294901760
    %v1622 = vsub.f32 %v1350, %v1621
    %v1623 = vand.u32 %v1622, 4294901760
    %v1624 = vsub.f32 %v1622, %v1623
    %v1625 = vand.u32 %v1624, 4294901760
    %1626 = vmatpush1.msra.mxu0 %v1625
    %v1627 = vand.u32 %v1353, 4294901760
    %v1628 = vsub.f32 %v1353, %v1627
    %v1629 = vand.u32 %v1628, 4294901760
    %v1630 = vsub.f32 %v1628, %v1629
    %v1631 = vand.u32 %v1630, 4294901760
    %1632 = vmatprep.subr.mxu0 %v1631
    %v1633 = vand.u32 %v1352, 4294901760
    %v1634 = vsub.f32 %v1352, %v1633
    %v1635 = vand.u32 %v1634, 4294901760
    %v1636 = vsub.f32 %v1634, %v1635
    %v1637 = vand.u32 %v1636, 4294901760
    %1638 = vmatpush1.msra.mxu0 %v1637
    %v1639 = vand.u32 %v1355, 4294901760
    %v1640 = vsub.f32 %v1355, %v1639
    %v1641 = vand.u32 %v1640, 4294901760
    %v1642 = vsub.f32 %v1640, %v1641
    %v1643 = vand.u32 %v1642, 4294901760
    %1644 = vmatprep.subr.mxu0 %v1643
    %v1645 = vand.u32 %v1354, 4294901760
    %v1646 = vsub.f32 %v1354, %v1645
    %v1647 = vand.u32 %v1646, 4294901760
    %v1648 = vsub.f32 %v1646, %v1647
    %v1649 = vand.u32 %v1648, 4294901760
    %1650 = vmatpush1.msra.mxu0 %v1649
    %v1651 = vand.u32 %v1357, 4294901760
    %v1652 = vsub.f32 %v1357, %v1651
    %v1653 = vand.u32 %v1652, 4294901760
    %v1654 = vsub.f32 %v1652, %v1653
    %v1655 = vand.u32 %v1654, 4294901760
    %1656 = vmatprep.subr.mxu0 %v1655
    %v1657 = vand.u32 %v1356, 4294901760
    %v1658 = vsub.f32 %v1356, %v1657
    %v1659 = vand.u32 %v1658, 4294901760
    %v1660 = vsub.f32 %v1658, %v1659
    %v1661 = vand.u32 %v1660, 4294901760
    %1662 = vmatpush1.msra.mxu0 %v1661
    %v1663 = vand.u32 %v1359, 4294901760
    %v1664 = vsub.f32 %v1359, %v1663
    %v1665 = vand.u32 %v1664, 4294901760
    %v1666 = vsub.f32 %v1664, %v1665
    %v1667 = vand.u32 %v1666, 4294901760
    %1668 = vmatprep.subr.mxu0 %v1667
    %v1669 = vand.u32 %v1358, 4294901760
    %v1670 = vsub.f32 %v1358, %v1669
    %v1671 = vand.u32 %v1670, 4294901760
    %v1672 = vsub.f32 %v1670, %v1671
    %v1673 = vand.u32 %v1672, 4294901760
    %1674 = vmatpush1.msra.mxu0 %v1673
    %v1675 = vand.u32 %v1361, 4294901760
    %v1676 = vsub.f32 %v1361, %v1675
    %v1677 = vand.u32 %v1676, 4294901760
    %v1678 = vsub.f32 %v1676, %v1677
    %v1679 = vand.u32 %v1678, 4294901760
    %1680 = vmatprep.subr.mxu0 %v1679
    %v1681 = vand.u32 %v1360, 4294901760
    %v1682 = vsub.f32 %v1360, %v1681
    %v1683 = vand.u32 %v1682, 4294901760
    %v1684 = vsub.f32 %v1682, %v1683
    %v1685 = vand.u32 %v1684, 4294901760
    %1686 = vmatpush1.msra.mxu0 %v1685
    %v1687 = vand.u32 %v1363, 4294901760
    %v1688 = vsub.f32 %v1363, %v1687
    %v1689 = vand.u32 %v1688, 4294901760
    %v1690 = vsub.f32 %v1688, %v1689
    %v1691 = vand.u32 %v1690, 4294901760
    %1692 = vmatprep.subr.mxu0 %v1691
    %v1693 = vand.u32 %v1362, 4294901760
    %v1694 = vsub.f32 %v1362, %v1693
    %v1695 = vand.u32 %v1694, 4294901760
    %v1696 = vsub.f32 %v1694, %v1695
    %v1697 = vand.u32 %v1696, 4294901760
    %1698 = vmatpush1.msra.mxu0 %v1697
    %v1699 = vand.u32 %v1365, 4294901760
    %v1700 = vsub.f32 %v1365, %v1699
    %v1701 = vand.u32 %v1700, 4294901760
    %v1702 = vsub.f32 %v1700, %v1701
    %v1703 = vand.u32 %v1702, 4294901760
    %1704 = vmatprep.subr.mxu0 %v1703
    %v1705 = vand.u32 %v1364, 4294901760
    %v1706 = vsub.f32 %v1364, %v1705
    %v1707 = vand.u32 %v1706, 4294901760
    %v1708 = vsub.f32 %v1706, %v1707
    %v1709 = vand.u32 %v1708, 4294901760
    %1710 = vmatpush1.msra.mxu0 %v1709
    %1711 = vmatprep.subr.mxu0 0.0
    %1712 = vmatpush1.msra.mxu0 0.0
    %1713 = vmatprep.subr.mxu0 0.0
    %1714 = vmatpush1.msra.mxu0 0.0
    %1715 = vmatprep.subr.mxu0 0.0
    %1716 = vmatpush1.msra.mxu0 0.0
    %1717 = vmatprep.subr.mxu0 0.0
    %1718 = vmatpush1.msra.mxu0 0.0
    %1719 = vmatprep.subr.mxu0 0.0
    %1720 = vmatpush1.msra.mxu0 0.0
    %1721 = vmatprep.subr.mxu0 0.0
    %1722 = vmatpush1.msra.mxu0 0.0
    %1723 = vmatprep.subr.mxu0 0.0
    %1724 = vmatpush1.msra.mxu0 0.0
    %1725 = vmatprep.subr.mxu0 0.0
    %1726 = vmatpush1.msra.mxu0 0.0
    %1727 = vmatprep.subr.mxu0 0.0
    %1728 = vmatpush1.msra.mxu0 0.0
    %1729 = vmatprep.subr.mxu0 0.0
    %1730 = vmatpush1.msra.mxu0 0.0
    %1731 = vmatprep.subr.mxu0 0.0
    %1732 = vmatpush1.msra.mxu0 0.0
    %1733 = vmatprep.subr.mxu0 0.0
    %1734 = vmatpush1.msra.mxu0 0.0
    %1735 = vmatprep.subr.mxu0 0.0
    %1736 = vmatpush1.msra.mxu0 0.0
    %1737 = vmatprep.subr.mxu0 0.0
    %1738 = vmatpush1.msra.mxu0 0.0
    %1739 = vmatprep.subr.mxu0 0.0
    %1740 = vmatpush1.msra.mxu0 0.0
    %1741 = vmatprep.subr.mxu0 0.0
    %1742 = vmatpush1.msra.mxu0 0.0
    %1743 = vmatprep.subr.mxu0 0.0
    %1744 = vmatpush1.msra.mxu0 0.0
    %1745 = vmatprep.subr.mxu0 0.0
    %1746 = vmatpush1.msra.mxu0 0.0
    %1747 = vmatprep.subr.mxu0 0.0
    %1748 = vmatpush1.msra.mxu0 0.0
    %1749 = vmatprep.subr.mxu0 0.0
    %1750 = vmatpush1.msra.mxu0 0.0
    %1751 = vmatprep.subr.mxu0 0.0
    %1752 = vmatpush1.msra.mxu0 0.0
    %1753 = vmatprep.subr.mxu0 0.0
    %1754 = vmatpush1.msra.mxu0 0.0
    %1755 = vmatprep.subr.mxu0 0.0
    %1756 = vmatpush1.msra.mxu0 0.0
    %1757 = vmatprep.subr.mxu0 0.0
    %1758 = vmatpush1.msra.mxu0 0.0
    %1759 = vmatprep.mubr.f32.mxu0 0.0
    %v1760 = vand.u32 %v1423, 4294901760
    %1761 = vmatmul.mubr.f32.gmra.mrb[0].mxu0 %v1760
    %v1762 = vpop.f32.mrb[0].mxu0
    %v1763 = vadd.f32 %v1534, %v1762
    %v1764 = vpop.f32.mrb[0].mxu0
    %v1765 = vadd.f32 %v1536, %v1764
    %1766 = vmatprep.mubr.f32.mxu0 0.0
    %v1767 = vand.u32 %v1426, 4294901760
    %1768 = vmatmul.mubr.f32.gmra.mrb[0].mxu0 %v1767
    %v1769 = vpop.f32.mrb[0].mxu0
    %v1770 = vadd.f32 %v1545, %v1769
    %v1771 = vpop.f32.mrb[0].mxu0
    %v1772 = vadd.f32 %v1547, %v1771
    %1773 = vmatprep.mubr.f32.mxu0 0.0
    %v1774 = vand.u32 %v1429, 4294901760
    %1775 = vmatmul.mubr.f32.gmra.mrb[0].mxu0 %v1774
    %v1776 = vpop.f32.mrb[0].mxu0
    %v1777 = vadd.f32 %v1556, %v1776
    %v1778 = vpop.f32.mrb[0].mxu0
    %v1779 = vadd.f32 %v1558, %v1778
    %1780 = vmatprep.mubr.f32.mxu0 0.0
    %v1781 = vand.u32 %v1432, 4294901760
    %1782 = vmatmul.mubr.f32.gmra.mrb[0].mxu0 %v1781
    %v1783 = vpop.f32.mrb[0].mxu0
    %v1784 = vadd.f32 %v1567, %v1783
    %v1785 = vpop.f32.mrb[0].mxu0
    %v1786 = vadd.f32 %v1569, %v1785
    %1787 = vmatprep.mubr.f32.mxu0 0.0
    %v1788 = vand.u32 %v1435, 4294901760
    %1789 = vmatmul.mubr.f32.gmra.mrb[0].mxu0 %v1788
    %v1790 = vpop.f32.mrb[0].mxu0
    %v1791 = vadd.f32 %v1578, %v1790
    %v1792 = vpop.f32.mrb[0].mxu0
    %v1793 = vadd.f32 %v1580, %v1792
    %1794 = vmatprep.mubr.f32.mxu0 0.0
    %v1795 = vand.u32 %v1438, 4294901760
    %1796 = vmatmul.mubr.f32.gmra.mrb[0].mxu0 %v1795
    %v1797 = vpop.f32.mrb[0].mxu0
    %v1798 = vadd.f32 %v1589, %v1797
    %v1799 = vpop.f32.mrb[0].mxu0
    %v1800 = vadd.f32 %v1591, %v1799
    %1801 = vmatprep.mubr.f32.mxu0 0.0
    %v1802 = vand.u32 %v1441, 4294901760
    %1803 = vmatmul.mubr.f32.gmra.mrb[0].mxu0 %v1802
    %v1804 = vpop.f32.mrb[0].mxu0
    %v1805 = vadd.f32 %v1600, %v1804
    %v1806 = vpop.f32.mrb[0].mxu0
    %v1807 = vadd.f32 %v1602, %v1806
    %1808 = vmatprep.mubr.f32.mxu0 0.0
    %v1809 = vand.u32 %v1444, 4294901760
    %1810 = vmatmul.mubr.f32.gmra.mrb[0].mxu0 %v1809
    %v1811 = vpop.f32.mrb[0].mxu0
    %v1812 = vadd.f32 %v1611, %v1811
    %v1813 = vpop.f32.mrb[0].mxu0
    %v1814 = vadd.f32 %v1613, %v1813
    %1815 = vdwg.mxu0
    %v1816 = vand.u32 %v1351, 4294901760
    %v1817 = vsub.f32 %v1351, %v1816
    %1818 = vmatprep.subr.mxu0 %v1817
    %v1819 = vand.u32 %v1350, 4294901760
    %v1820 = vsub.f32 %v1350, %v1819
    %1821 = vmatpush1.msra.mxu0 %v1820
    %v1822 = vand.u32 %v1353, 4294901760
    %v1823 = vsub.f32 %v1353, %v1822
    %1824 = vmatprep.subr.mxu0 %v1823
    %v1825 = vand.u32 %v1352, 4294901760
    %v1826 = vsub.f32 %v1352, %v1825
    %1827 = vmatpush1.msra.mxu0 %v1826
    %v1828 = vand.u32 %v1355, 4294901760
    %v1829 = vsub.f32 %v1355, %v1828
    %1830 = vmatprep.subr.mxu0 %v1829
    %v1831 = vand.u32 %v1354, 4294901760
    %v1832 = vsub.f32 %v1354, %v1831
    %1833 = vmatpush1.msra.mxu0 %v1832
    %v1834 = vand.u32 %v1357, 4294901760
    %v1835 = vsub.f32 %v1357, %v1834
    %1836 = vmatprep.subr.mxu0 %v1835
    %v1837 = vand.u32 %v1356, 4294901760
    %v1838 = vsub.f32 %v1356, %v1837
    %1839 = vmatpush1.msra.mxu0 %v1838
    %v1840 = vand.u32 %v1359, 4294901760
    %v1841 = vsub.f32 %v1359, %v1840
    %1842 = vmatprep.subr.mxu0 %v1841
    %v1843 = vand.u32 %v1358, 4294901760
    %v1844 = vsub.f32 %v1358, %v1843
    %1845 = vmatpush1.msra.mxu0 %v1844
    %v1846 = vand.u32 %v1361, 4294901760
    %v1847 = vsub.f32 %v1361, %v1846
    %1848 = vmatprep.subr.mxu0 %v1847
    %v1849 = vand.u32 %v1360, 4294901760
    %v1850 = vsub.f32 %v1360, %v1849
    %1851 = vmatpush1.msra.mxu0 %v1850
    %v1852 = vand.u32 %v1363, 4294901760
    %v1853 = vsub.f32 %v1363, %v1852
    %1854 = vmatprep.subr.mxu0 %v1853
    %v1855 = vand.u32 %v1362, 4294901760
    %v1856 = vsub.f32 %v1362, %v1855
    %1857 = vmatpush1.msra.mxu0 %v1856
    %v1858 = vand.u32 %v1365, 4294901760
    %v1859 = vsub.f32 %v1365, %v1858
    %1860 = vmatprep.subr.mxu0 %v1859
    %v1861 = vand.u32 %v1364, 4294901760
    %v1862 = vsub.f32 %v1364, %v1861
    %1863 = vmatpush1.msra.mxu0 %v1862
    %1864 = vmatprep.subr.mxu0 0.0
    %1865 = vmatpush1.msra.mxu0 0.0
    %1866 = vmatprep.subr.mxu0 0.0
    %1867 = vmatpush1.msra.mxu0 0.0
    %1868 = vmatprep.subr.mxu0 0.0
    %1869 = vmatpush1.msra.mxu0 0.0
    %1870 = vmatprep.subr.mxu0 0.0
    %1871 = vmatpush1.msra.mxu0 0.0
    %1872 = vmatprep.subr.mxu0 0.0
    %1873 = vmatpush1.msra.mxu0 0.0
    %1874 = vmatprep.subr.mxu0 0.0
    %1875 = vmatpush1.msra.mxu0 0.0
    %1876 = vmatprep.subr.mxu0 0.0
    %1877 = vmatpush1.msra.mxu0 0.0
    %1878 = vmatprep.subr.mxu0 0.0
    %1879 = vmatpush1.msra.mxu0 0.0
    %1880 = vmatprep.subr.mxu0 0.0
    %1881 = vmatpush1.msra.mxu0 0.0
    %1882 = vmatprep.subr.mxu0 0.0
    %1883 = vmatpush1.msra.mxu0 0.0
    %1884 = vmatprep.subr.mxu0 0.0
    %1885 = vmatpush1.msra.mxu0 0.0
    %1886 = vmatprep.subr.mxu0 0.0
    %1887 = vmatpush1.msra.mxu0 0.0
    %1888 = vmatprep.subr.mxu0 0.0
    %1889 = vmatpush1.msra.mxu0 0.0
    %1890 = vmatprep.subr.mxu0 0.0
    %1891 = vmatpush1.msra.mxu0 0.0
    %1892 = vmatprep.subr.mxu0 0.0
    %1893 = vmatpush1.msra.mxu0 0.0
    %1894 = vmatprep.subr.mxu0 0.0
    %1895 = vmatpush1.msra.mxu0 0.0
    %1896 = vmatprep.subr.mxu0 0.0
    %1897 = vmatpush1.msra.mxu0 0.0
    %1898 = vmatprep.subr.mxu0 0.0
    %1899 = vmatpush1.msra.mxu0 0.0
    %1900 = vmatprep.subr.mxu0 0.0
    %1901 = vmatpush1.msra.mxu0 0.0
    %1902 = vmatprep.subr.mxu0 0.0
    %1903 = vmatpush1.msra.mxu0 0.0
    %1904 = vmatprep.subr.mxu0 0.0
    %1905 = vmatpush1.msra.mxu0 0.0
    %1906 = vmatprep.subr.mxu0 0.0
    %1907 = vmatpush1.msra.mxu0 0.0
    %1908 = vmatprep.subr.mxu0 0.0
    %1909 = vmatpush1.msra.mxu0 0.0
    %1910 = vmatprep.subr.mxu0 0.0
    %1911 = vmatpush1.msra.mxu0 0.0
    %1912 = vmatprep.mubr.f32.mxu0 0.0
    %v1913 = vand.u32 %v1423, 4294901760
    %v1914 = vsub.f32 %v1423, %v1913
    %1915 = vmatmul.mubr.f32.gmra.mrb[0].mxu0 %v1914
    %v1916 = vpop.f32.mrb[0].mxu0
    %v1917 = vadd.f32 %v1763, %v1916
    %v1918 = vpop.f32.mrb[0].mxu0
    %v1919 = vadd.f32 %v1765, %v1918
    %1920 = vmatprep.mubr.f32.mxu0 0.0
    %v1921 = vand.u32 %v1426, 4294901760
    %v1922 = vsub.f32 %v1426, %v1921
    %1923 = vmatmul.mubr.f32.gmra.mrb[0].mxu0 %v1922
    %v1924 = vpop.f32.mrb[0].mxu0
    %v1925 = vadd.f32 %v1770, %v1924
    %v1926 = vpop.f32.mrb[0].mxu0
    %v1927 = vadd.f32 %v1772, %v1926
    %1928 = vmatprep.mubr.f32.mxu0 0.0
    %v1929 = vand.u32 %v1429, 4294901760
    %v1930 = vsub.f32 %v1429, %v1929
    %1931 = vmatmul.mubr.f32.gmra.mrb[0].mxu0 %v1930
    %v1932 = vpop.f32.mrb[0].mxu0
    %v1933 = vadd.f32 %v1777, %v1932
    %v1934 = vpop.f32.mrb[0].mxu0
    %v1935 = vadd.f32 %v1779, %v1934
    %1936 = vmatprep.mubr.f32.mxu0 0.0
    %v1937 = vand.u32 %v1432, 4294901760
    %v1938 = vsub.f32 %v1432, %v1937
    %1939 = vmatmul.mubr.f32.gmra.mrb[0].mxu0 %v1938
    %v1940 = vpop.f32.mrb[0].mxu0
    %v1941 = vadd.f32 %v1784, %v1940
    %v1942 = vpop.f32.mrb[0].mxu0
    %v1943 = vadd.f32 %v1786, %v1942
    %1944 = vmatprep.mubr.f32.mxu0 0.0
    %v1945 = vand.u32 %v1435, 4294901760
    %v1946 = vsub.f32 %v1435, %v1945
    %1947 = vmatmul.mubr.f32.gmra.mrb[0].mxu0 %v1946
    %v1948 = vpop.f32.mrb[0].mxu0
    %v1949 = vadd.f32 %v1791, %v1948
    %v1950 = vpop.f32.mrb[0].mxu0
    %v1951 = vadd.f32 %v1793, %v1950
    %1952 = vmatprep.mubr.f32.mxu0 0.0
    %v1953 = vand.u32 %v1438, 4294901760
    %v1954 = vsub.f32 %v1438, %v1953
    %1955 = vmatmul.mubr.f32.gmra.mrb[0].mxu0 %v1954
    %v1956 = vpop.f32.mrb[0].mxu0
    %v1957 = vadd.f32 %v1798, %v1956
    %v1958 = vpop.f32.mrb[0].mxu0
    %v1959 = vadd.f32 %v1800, %v1958
    %1960 = vmatprep.mubr.f32.mxu0 0.0
    %v1961 = vand.u32 %v1441, 4294901760
    %v1962 = vsub.f32 %v1441, %v1961
    %1963 = vmatmul.mubr.f32.gmra.mrb[0].mxu0 %v1962
    %v1964 = vpop.f32.mrb[0].mxu0
    %v1965 = vadd.f32 %v1805, %v1964
    %v1966 = vpop.f32.mrb[0].mxu0
    %v1967 = vadd.f32 %v1807, %v1966
    %1968 = vmatprep.mubr.f32.mxu0 0.0
    %v1969 = vand.u32 %v1444, 4294901760
    %v1970 = vsub.f32 %v1444, %v1969
    %1971 = vmatmul.mubr.f32.gmra.mrb[0].mxu0 %v1970
    %v1972 = vpop.f32.mrb[0].mxu0
    %v1973 = vadd.f32 %v1812, %v1972
    %v1974 = vpop.f32.mrb[0].mxu0
    %v1975 = vadd.f32 %v1814, %v1974
    %1976 = vdwg.mxu0
    %v1977 = vand.u32 %v1351, 4294901760
    %1978 = vmatprep.subr.mxu0 %v1977
    %v1979 = vand.u32 %v1350, 4294901760
    %1980 = vmatpush1.msra.mxu0 %v1979
    %v1981 = vand.u32 %v1353, 4294901760
    %1982 = vmatprep.subr.mxu0 %v1981
    %v1983 = vand.u32 %v1352, 4294901760
    %1984 = vmatpush1.msra.mxu0 %v1983
    %v1985 = vand.u32 %v1355, 4294901760
    %1986 = vmatprep.subr.mxu0 %v1985
    %v1987 = vand.u32 %v1354, 4294901760
    %1988 = vmatpush1.msra.mxu0 %v1987
    %v1989 = vand.u32 %v1357, 4294901760
    %1990 = vmatprep.subr.mxu0 %v1989
    %v1991 = vand.u32 %v1356, 4294901760
    %1992 = vmatpush1.msra.mxu0 %v1991
    %v1993 = vand.u32 %v1359, 4294901760
    %1994 = vmatprep.subr.mxu0 %v1993
    %v1995 = vand.u32 %v1358, 4294901760
    %1996 = vmatpush1.msra.mxu0 %v1995
    %v1997 = vand.u32 %v1361, 4294901760
    %1998 = vmatprep.subr.mxu0 %v1997
    %v1999 = vand.u32 %v1360, 4294901760
    %2000 = vmatpush1.msra.mxu0 %v1999
    %v2001 = vand.u32 %v1363, 4294901760
    %2002 = vmatprep.subr.mxu0 %v2001
    %v2003 = vand.u32 %v1362, 4294901760
    %2004 = vmatpush1.msra.mxu0 %v2003
    %v2005 = vand.u32 %v1365, 4294901760
    %2006 = vmatprep.subr.mxu0 %v2005
    %v2007 = vand.u32 %v1364, 4294901760
    %2008 = vmatpush1.msra.mxu0 %v2007
    %2009 = vmatprep.subr.mxu0 0.0
    %2010 = vmatpush1.msra.mxu0 0.0
    %2011 = vmatprep.subr.mxu0 0.0
    %2012 = vmatpush1.msra.mxu0 0.0
    %2013 = vmatprep.subr.mxu0 0.0
    %2014 = vmatpush1.msra.mxu0 0.0
    %2015 = vmatprep.subr.mxu0 0.0
    %2016 = vmatpush1.msra.mxu0 0.0
    %2017 = vmatprep.subr.mxu0 0.0
    %2018 = vmatpush1.msra.mxu0 0.0
    %2019 = vmatprep.subr.mxu0 0.0
    %2020 = vmatpush1.msra.mxu0 0.0
    %2021 = vmatprep.subr.mxu0 0.0
    %2022 = vmatpush1.msra.mxu0 0.0
    %2023 = vmatprep.subr.mxu0 0.0
    %2024 = vmatpush1.msra.mxu0 0.0
    %2025 = vmatprep.subr.mxu0 0.0
    %2026 = vmatpush1.msra.mxu0 0.0
    %2027 = vmatprep.subr.mxu0 0.0
    %2028 = vmatpush1.msra.mxu0 0.0
    %2029 = vmatprep.subr.mxu0 0.0
    %2030 = vmatpush1.msra.mxu0 0.0
    %2031 = vmatprep.subr.mxu0 0.0
    %2032 = vmatpush1.msra.mxu0 0.0
    %2033 = vmatprep.subr.mxu0 0.0
    %2034 = vmatpush1.msra.mxu0 0.0
    %2035 = vmatprep.subr.mxu0 0.0
    %2036 = vmatpush1.msra.mxu0 0.0
    %2037 = vmatprep.subr.mxu0 0.0
    %2038 = vmatpush1.msra.mxu0 0.0
    %2039 = vmatprep.subr.mxu0 0.0
    %2040 = vmatpush1.msra.mxu0 0.0
    %2041 = vmatprep.subr.mxu0 0.0
    %2042 = vmatpush1.msra.mxu0 0.0
    %2043 = vmatprep.subr.mxu0 0.0
    %2044 = vmatpush1.msra.mxu0 0.0
    %2045 = vmatprep.subr.mxu0 0.0
    %2046 = vmatpush1.msra.mxu0 0.0
    %2047 = vmatprep.subr.mxu0 0.0
    %2048 = vmatpush1.msra.mxu0 0.0
    %2049 = vmatprep.subr.mxu0 0.0
    %2050 = vmatpush1.msra.mxu0 0.0
    %2051 = vmatprep.subr.mxu0 0.0
    %2052 = vmatpush1.msra.mxu0 0.0
    %2053 = vmatprep.subr.mxu0 0.0
    %2054 = vmatpush1.msra.mxu0 0.0
    %2055 = vmatprep.subr.mxu0 0.0
    %2056 = vmatpush1.msra.mxu0 0.0
    %2057 = vmatprep.mubr.f32.mxu0 0.0
    %v2058 = vand.u32 %v1423, 4294901760
    %v2059 = vsub.f32 %v1423, %v2058
    %v2060 = vand.u32 %v2059, 4294901760
    %2061 = vmatmul.mubr.f32.gmra.mrb[0].mxu0 %v2060
    %v2062 = vpop.f32.mrb[0].mxu0
    %v2063 = vadd.f32 %v1917, %v2062
    %v2064 = vpop.f32.mrb[0].mxu0
    %v2065 = vadd.f32 %v1919, %v2064
    %2066 = vmatprep.mubr.f32.mxu0 0.0
    %v2067 = vand.u32 %v1426, 4294901760
    %v2068 = vsub.f32 %v1426, %v2067
    %v2069 = vand.u32 %v2068, 4294901760
    %2070 = vmatmul.mubr.f32.gmra.mrb[0].mxu0 %v2069
    %v2071 = vpop.f32.mrb[0].mxu0
    %v2072 = vadd.f32 %v1925, %v2071
    %v2073 = vpop.f32.mrb[0].mxu0
    %v2074 = vadd.f32 %v1927, %v2073
    %2075 = vmatprep.mubr.f32.mxu0 0.0
    %v2076 = vand.u32 %v1429, 4294901760
    %v2077 = vsub.f32 %v1429, %v2076
    %v2078 = vand.u32 %v2077, 4294901760
    %2079 = vmatmul.mubr.f32.gmra.mrb[0].mxu0 %v2078
    %v2080 = vpop.f32.mrb[0].mxu0
    %v2081 = vadd.f32 %v1933, %v2080
    %v2082 = vpop.f32.mrb[0].mxu0
    %v2083 = vadd.f32 %v1935, %v2082
    %2084 = vmatprep.mubr.f32.mxu0 0.0
    %v2085 = vand.u32 %v1432, 4294901760
    %v2086 = vsub.f32 %v1432, %v2085
    %v2087 = vand.u32 %v2086, 4294901760
    %2088 = vmatmul.mubr.f32.gmra.mrb[0].mxu0 %v2087
    %v2089 = vpop.f32.mrb[0].mxu0
    %v2090 = vadd.f32 %v1941, %v2089
    %v2091 = vpop.f32.mrb[0].mxu0
    %v2092 = vadd.f32 %v1943, %v2091
    %2093 = vmatprep.mubr.f32.mxu0 0.0
    %v2094 = vand.u32 %v1435, 4294901760
    %v2095 = vsub.f32 %v1435, %v2094
    %v2096 = vand.u32 %v2095, 4294901760
    %2097 = vmatmul.mubr.f32.gmra.mrb[0].mxu0 %v2096
    %v2098 = vpop.f32.mrb[0].mxu0
    %v2099 = vadd.f32 %v1949, %v2098
    %v2100 = vpop.f32.mrb[0].mxu0
    %v2101 = vadd.f32 %v1951, %v2100
    %2102 = vmatprep.mubr.f32.mxu0 0.0
    %v2103 = vand.u32 %v1438, 4294901760
    %v2104 = vsub.f32 %v1438, %v2103
    %v2105 = vand.u32 %v2104, 4294901760
    %2106 = vmatmul.mubr.f32.gmra.mrb[0].mxu0 %v2105
    %v2107 = vpop.f32.mrb[0].mxu0
    %v2108 = vadd.f32 %v1957, %v2107
    %v2109 = vpop.f32.mrb[0].mxu0
    %v2110 = vadd.f32 %v1959, %v2109
    %2111 = vmatprep.mubr.f32.mxu0 0.0
    %v2112 = vand.u32 %v1441, 4294901760
    %v2113 = vsub.f32 %v1441, %v2112
    %v2114 = vand.u32 %v2113, 4294901760
    %2115 = vmatmul.mubr.f32.gmra.mrb[0].mxu0 %v2114
    %v2116 = vpop.f32.mrb[0].mxu0
    %v2117 = vadd.f32 %v1965, %v2116
    %v2118 = vpop.f32.mrb[0].mxu0
    %v2119 = vadd.f32 %v1967, %v2118
    %2120 = vmatprep.mubr.f32.mxu0 0.0
    %v2121 = vand.u32 %v1444, 4294901760
    %v2122 = vsub.f32 %v1444, %v2121
    %v2123 = vand.u32 %v2122, 4294901760
    %2124 = vmatmul.mubr.f32.gmra.mrb[0].mxu0 %v2123
    %v2125 = vpop.f32.mrb[0].mxu0
    %v2126 = vadd.f32 %v1973, %v2125
    %v2127 = vpop.f32.mrb[0].mxu0
    %v2128 = vadd.f32 %v1975, %v2127
    %2129 = vdwg.mxu0
    %v2130 = vand.u32 %v1351, 4294901760
    %v2131 = vsub.f32 %v1351, %v2130
    %v2132 = vand.u32 %v2131, 4294901760
    %2133 = vmatprep.subr.mxu0 %v2132
    %v2134 = vand.u32 %v1350, 4294901760
    %v2135 = vsub.f32 %v1350, %v2134
    %v2136 = vand.u32 %v2135, 4294901760
    %2137 = vmatpush1.msra.mxu0 %v2136
    %v2138 = vand.u32 %v1353, 4294901760
    %v2139 = vsub.f32 %v1353, %v2138
    %v2140 = vand.u32 %v2139, 4294901760
    %2141 = vmatprep.subr.mxu0 %v2140
    %v2142 = vand.u32 %v1352, 4294901760
    %v2143 = vsub.f32 %v1352, %v2142
    %v2144 = vand.u32 %v2143, 4294901760
    %2145 = vmatpush1.msra.mxu0 %v2144
    %v2146 = vand.u32 %v1355, 4294901760
    %v2147 = vsub.f32 %v1355, %v2146
    %v2148 = vand.u32 %v2147, 4294901760
    %2149 = vmatprep.subr.mxu0 %v2148
    %v2150 = vand.u32 %v1354, 4294901760
    %v2151 = vsub.f32 %v1354, %v2150
    %v2152 = vand.u32 %v2151, 4294901760
    %2153 = vmatpush1.msra.mxu0 %v2152
    %v2154 = vand.u32 %v1357, 4294901760
    %v2155 = vsub.f32 %v1357, %v2154
    %v2156 = vand.u32 %v2155, 4294901760
    %2157 = vmatprep.subr.mxu0 %v2156
    %v2158 = vand.u32 %v1356, 4294901760
    %v2159 = vsub.f32 %v1356, %v2158
    %v2160 = vand.u32 %v2159, 4294901760
    %2161 = vmatpush1.msra.mxu0 %v2160
    %v2162 = vand.u32 %v1359, 4294901760
    %v2163 = vsub.f32 %v1359, %v2162
    %v2164 = vand.u32 %v2163, 4294901760
    %2165 = vmatprep.subr.mxu0 %v2164
    %v2166 = vand.u32 %v1358, 4294901760
    %v2167 = vsub.f32 %v1358, %v2166
    %v2168 = vand.u32 %v2167, 4294901760
    %2169 = vmatpush1.msra.mxu0 %v2168
    %v2170 = vand.u32 %v1361, 4294901760
    %v2171 = vsub.f32 %v1361, %v2170
    %v2172 = vand.u32 %v2171, 4294901760
    %2173 = vmatprep.subr.mxu0 %v2172
    %v2174 = vand.u32 %v1360, 4294901760
    %v2175 = vsub.f32 %v1360, %v2174
    %v2176 = vand.u32 %v2175, 4294901760
    %2177 = vmatpush1.msra.mxu0 %v2176
    %v2178 = vand.u32 %v1363, 4294901760
    %v2179 = vsub.f32 %v1363, %v2178
    %v2180 = vand.u32 %v2179, 4294901760
    %2181 = vmatprep.subr.mxu0 %v2180
    %v2182 = vand.u32 %v1362, 4294901760
    %v2183 = vsub.f32 %v1362, %v2182
    %v2184 = vand.u32 %v2183, 4294901760
    %2185 = vmatpush1.msra.mxu0 %v2184
    %v2186 = vand.u32 %v1365, 4294901760
    %v2187 = vsub.f32 %v1365, %v2186
    %v2188 = vand.u32 %v2187, 4294901760
    %2189 = vmatprep.subr.mxu0 %v2188
    %v2190 = vand.u32 %v1364, 4294901760
    %v2191 = vsub.f32 %v1364, %v2190
    %v2192 = vand.u32 %v2191, 4294901760
    %2193 = vmatpush1.msra.mxu0 %v2192
    %2194 = vmatprep.subr.mxu0 0.0
    %2195 = vmatpush1.msra.mxu0 0.0
    %2196 = vmatprep.subr.mxu0 0.0
    %2197 = vmatpush1.msra.mxu0 0.0
    %2198 = vmatprep.subr.mxu0 0.0
    %2199 = vmatpush1.msra.mxu0 0.0
    %2200 = vmatprep.subr.mxu0 0.0
    %2201 = vmatpush1.msra.mxu0 0.0
    %2202 = vmatprep.subr.mxu0 0.0
    %2203 = vmatpush1.msra.mxu0 0.0
    %2204 = vmatprep.subr.mxu0 0.0
    %2205 = vmatpush1.msra.mxu0 0.0
    %2206 = vmatprep.subr.mxu0 0.0
    %2207 = vmatpush1.msra.mxu0 0.0
    %2208 = vmatprep.subr.mxu0 0.0
    %2209 = vmatpush1.msra.mxu0 0.0
    %2210 = vmatprep.subr.mxu0 0.0
    %2211 = vmatpush1.msra.mxu0 0.0
    %2212 = vmatprep.subr.mxu0 0.0
    %2213 = vmatpush1.msra.mxu0 0.0
    %2214 = vmatprep.subr.mxu0 0.0
    %2215 = vmatpush1.msra.mxu0 0.0
    %2216 = vmatprep.subr.mxu0 0.0
    %2217 = vmatpush1.msra.mxu0 0.0
    %2218 = vmatprep.subr.mxu0 0.0
    %2219 = vmatpush1.msra.mxu0 0.0
    %2220 = vmatprep.subr.mxu0 0.0
    %2221 = vmatpush1.msra.mxu0 0.0
    %2222 = vmatprep.subr.mxu0 0.0
    %2223 = vmatpush1.msra.mxu0 0.0
    %2224 = vmatprep.subr.mxu0 0.0
    %2225 = vmatpush1.msra.mxu0 0.0
    %2226 = vmatprep.subr.mxu0 0.0
    %2227 = vmatpush1.msra.mxu0 0.0
    %2228 = vmatprep.subr.mxu0 0.0
    %2229 = vmatpush1.msra.mxu0 0.0
    %2230 = vmatprep.subr.mxu0 0.0
    %2231 = vmatpush1.msra.mxu0 0.0
    %2232 = vmatprep.subr.mxu0 0.0
    %2233 = vmatpush1.msra.mxu0 0.0
    %2234 = vmatprep.subr.mxu0 0.0
    %2235 = vmatpush1.msra.mxu0 0.0
    %2236 = vmatprep.subr.mxu0 0.0
    %2237 = vmatpush1.msra.mxu0 0.0
    %2238 = vmatprep.subr.mxu0 0.0
    %2239 = vmatpush1.msra.mxu0 0.0
    %2240 = vmatprep.subr.mxu0 0.0
    %2241 = vmatpush1.msra.mxu0 0.0
    %2242 = vmatprep.mubr.f32.mxu0 0.0
    %v2243 = vand.u32 %v1423, 4294901760
    %2244 = vmatmul.mubr.f32.gmra.mrb[0].mxu0 %v2243
    %v2245 = vpop.f32.mrb[0].mxu0
    %v2246 = vadd.f32 %v2063, %v2245
    %v2247 = vpop.f32.mrb[0].mxu0
    %v2248 = vadd.f32 %v2065, %v2247
    %2249 = vmatprep.mubr.f32.mxu0 0.0
    %v2250 = vand.u32 %v1426, 4294901760
    %2251 = vmatmul.mubr.f32.gmra.mrb[0].mxu0 %v2250
    %v2252 = vpop.f32.mrb[0].mxu0
    %v2253 = vadd.f32 %v2072, %v2252
    %v2254 = vpop.f32.mrb[0].mxu0
    %v2255 = vadd.f32 %v2074, %v2254
    %2256 = vmatprep.mubr.f32.mxu0 0.0
    %v2257 = vand.u32 %v1429, 4294901760
    %2258 = vmatmul.mubr.f32.gmra.mrb[0].mxu0 %v2257
    %v2259 = vpop.f32.mrb[0].mxu0
    %v2260 = vadd.f32 %v2081, %v2259
    %v2261 = vpop.f32.mrb[0].mxu0
    %v2262 = vadd.f32 %v2083, %v2261
    %2263 = vmatprep.mubr.f32.mxu0 0.0
    %v2264 = vand.u32 %v1432, 4294901760
    %2265 = vmatmul.mubr.f32.gmra.mrb[0].mxu0 %v2264
    %v2266 = vpop.f32.mrb[0].mxu0
    %v2267 = vadd.f32 %v2090, %v2266
    %v2268 = vpop.f32.mrb[0].mxu0
    %v2269 = vadd.f32 %v2092, %v2268
    %2270 = vmatprep.mubr.f32.mxu0 0.0
    %v2271 = vand.u32 %v1435, 4294901760
    %2272 = vmatmul.mubr.f32.gmra.mrb[0].mxu0 %v2271
    %v2273 = vpop.f32.mrb[0].mxu0
    %v2274 = vadd.f32 %v2099, %v2273
    %v2275 = vpop.f32.mrb[0].mxu0
    %v2276 = vadd.f32 %v2101, %v2275
    %2277 = vmatprep.mubr.f32.mxu0 0.0
    %v2278 = vand.u32 %v1438, 4294901760
    %2279 = vmatmul.mubr.f32.gmra.mrb[0].mxu0 %v2278
    %v2280 = vpop.f32.mrb[0].mxu0
    %v2281 = vadd.f32 %v2108, %v2280
    %v2282 = vpop.f32.mrb[0].mxu0
    %v2283 = vadd.f32 %v2110, %v2282
    %2284 = vmatprep.mubr.f32.mxu0 0.0
    %v2285 = vand.u32 %v1441, 4294901760
    %2286 = vmatmul.mubr.f32.gmra.mrb[0].mxu0 %v2285
    %v2287 = vpop.f32.mrb[0].mxu0
    %v2288 = vadd.f32 %v2117, %v2287
    %v2289 = vpop.f32.mrb[0].mxu0
    %v2290 = vadd.f32 %v2119, %v2289
    %2291 = vmatprep.mubr.f32.mxu0 0.0
    %v2292 = vand.u32 %v1444, 4294901760
    %2293 = vmatmul.mubr.f32.gmra.mrb[0].mxu0 %v2292
    %v2294 = vpop.f32.mrb[0].mxu0
    %v2295 = vadd.f32 %v2126, %v2294
    %v2296 = vpop.f32.mrb[0].mxu0
    %v2297 = vadd.f32 %v2128, %v2296
    %2298 = vdwg.mxu0
    %v2299 = vand.u32 %v1351, 4294901760
    %2300 = vmatprep.subr.mxu0 %v2299
    %v2301 = vand.u32 %v1350, 4294901760
    %2302 = vmatpush1.msra.mxu0 %v2301
    %v2303 = vand.u32 %v1353, 4294901760
    %2304 = vmatprep.subr.mxu0 %v2303
    %v2305 = vand.u32 %v1352, 4294901760
    %2306 = vmatpush1.msra.mxu0 %v2305
    %v2307 = vand.u32 %v1355, 4294901760
    %2308 = vmatprep.subr.mxu0 %v2307
    %v2309 = vand.u32 %v1354, 4294901760
    %2310 = vmatpush1.msra.mxu0 %v2309
    %v2311 = vand.u32 %v1357, 4294901760
    %2312 = vmatprep.subr.mxu0 %v2311
    %v2313 = vand.u32 %v1356, 4294901760
    %2314 = vmatpush1.msra.mxu0 %v2313
    %v2315 = vand.u32 %v1359, 4294901760
    %2316 = vmatprep.subr.mxu0 %v2315
    %v2317 = vand.u32 %v1358, 4294901760
    %2318 = vmatpush1.msra.mxu0 %v2317
    %v2319 = vand.u32 %v1361, 4294901760
    %2320 = vmatprep.subr.mxu0 %v2319
    %v2321 = vand.u32 %v1360, 4294901760
    %2322 = vmatpush1.msra.mxu0 %v2321
    %v2323 = vand.u32 %v1363, 4294901760
    %2324 = vmatprep.subr.mxu0 %v2323
    %v2325 = vand.u32 %v1362, 4294901760
    %2326 = vmatpush1.msra.mxu0 %v2325
    %v2327 = vand.u32 %v1365, 4294901760
    %2328 = vmatprep.subr.mxu0 %v2327
    %v2329 = vand.u32 %v1364, 4294901760
    %2330 = vmatpush1.msra.mxu0 %v2329
    %2331 = vmatprep.subr.mxu0 0.0
    %2332 = vmatpush1.msra.mxu0 0.0
    %2333 = vmatprep.subr.mxu0 0.0
    %2334 = vmatpush1.msra.mxu0 0.0
    %2335 = vmatprep.subr.mxu0 0.0
    %2336 = vmatpush1.msra.mxu0 0.0
    %2337 = vmatprep.subr.mxu0 0.0
    %2338 = vmatpush1.msra.mxu0 0.0
    %2339 = vmatprep.subr.mxu0 0.0
    %2340 = vmatpush1.msra.mxu0 0.0
    %2341 = vmatprep.subr.mxu0 0.0
    %2342 = vmatpush1.msra.mxu0 0.0
    %2343 = vmatprep.subr.mxu0 0.0
    %2344 = vmatpush1.msra.mxu0 0.0
    %2345 = vmatprep.subr.mxu0 0.0
    %2346 = vmatpush1.msra.mxu0 0.0
    %2347 = vmatprep.subr.mxu0 0.0
    %2348 = vmatpush1.msra.mxu0 0.0
    %2349 = vmatprep.subr.mxu0 0.0
    %2350 = vmatpush1.msra.mxu0 0.0
    %2351 = vmatprep.subr.mxu0 0.0
    %2352 = vmatpush1.msra.mxu0 0.0
    %2353 = vmatprep.subr.mxu0 0.0
    %2354 = vmatpush1.msra.mxu0 0.0
    %2355 = vmatprep.subr.mxu0 0.0
    %2356 = vmatpush1.msra.mxu0 0.0
    %2357 = vmatprep.subr.mxu0 0.0
    %2358 = vmatpush1.msra.mxu0 0.0
    %2359 = vmatprep.subr.mxu0 0.0
    %2360 = vmatpush1.msra.mxu0 0.0
    %2361 = vmatprep.subr.mxu0 0.0
    %2362 = vmatpush1.msra.mxu0 0.0
    %2363 = vmatprep.subr.mxu0 0.0
    %2364 = vmatpush1.msra.mxu0 0.0
    %2365 = vmatprep.subr.mxu0 0.0
    %2366 = vmatpush1.msra.mxu0 0.0
    %2367 = vmatprep.subr.mxu0 0.0
    %2368 = vmatpush1.msra.mxu0 0.0
    %2369 = vmatprep.subr.mxu0 0.0
    %2370 = vmatpush1.msra.mxu0 0.0
    %2371 = vmatprep.subr.mxu0 0.0
    %2372 = vmatpush1.msra.mxu0 0.0
    %2373 = vmatprep.subr.mxu0 0.0
    %2374 = vmatpush1.msra.mxu0 0.0
    %2375 = vmatprep.subr.mxu0 0.0
    %2376 = vmatpush1.msra.mxu0 0.0
    %2377 = vmatprep.subr.mxu0 0.0
    %2378 = vmatpush1.msra.mxu0 0.0
    %2379 = vmatprep.mubr.f32.mxu0 0.0
    %v2380 = vand.u32 %v1423, 4294901760
    %2381 = vmatmul.mubr.f32.gmra.mrb[0].mxu0 %v2380
    %v2382 = vpop.f32.mrb[0].mxu0
    %v2383 = vadd.f32 %v2246, %v2382
    %v2384 = vpop.f32.mrb[0].mxu0
    %v2385 = vadd.f32 %v2248, %v2384
    %2386 = vmatprep.mubr.f32.mxu0 0.0
    %v2387 = vand.u32 %v1426, 4294901760
    %2388 = vmatmul.mubr.f32.gmra.mrb[0].mxu0 %v2387
    %v2389 = vpop.f32.mrb[0].mxu0
    %v2390 = vadd.f32 %v2253, %v2389
    %v2391 = vpop.f32.mrb[0].mxu0
    %v2392 = vadd.f32 %v2255, %v2391
    %2393 = vmatprep.mubr.f32.mxu0 0.0
    %v2394 = vand.u32 %v1429, 4294901760
    %2395 = vmatmul.mubr.f32.gmra.mrb[0].mxu0 %v2394
    %v2396 = vpop.f32.mrb[0].mxu0
    %v2397 = vadd.f32 %v2260, %v2396
    %v2398 = vpop.f32.mrb[0].mxu0
    %v2399 = vadd.f32 %v2262, %v2398
    %2400 = vmatprep.mubr.f32.mxu0 0.0
    %v2401 = vand.u32 %v1432, 4294901760
    %2402 = vmatmul.mubr.f32.gmra.mrb[0].mxu0 %v2401
    %v2403 = vpop.f32.mrb[0].mxu0
    %v2404 = vadd.f32 %v2267, %v2403
    %v2405 = vpop.f32.mrb[0].mxu0
    %v2406 = vadd.f32 %v2269, %v2405
    %2407 = vmatprep.mubr.f32.mxu0 0.0
    %v2408 = vand.u32 %v1435, 4294901760
    %2409 = vmatmul.mubr.f32.gmra.mrb[0].mxu0 %v2408
    %v2410 = vpop.f32.mrb[0].mxu0
    %v2411 = vadd.f32 %v2274, %v2410
    %v2412 = vpop.f32.mrb[0].mxu0
    %v2413 = vadd.f32 %v2276, %v2412
    %2414 = vmatprep.mubr.f32.mxu0 0.0
    %v2415 = vand.u32 %v1438, 4294901760
    %2416 = vmatmul.mubr.f32.gmra.mrb[0].mxu0 %v2415
    %v2417 = vpop.f32.mrb[0].mxu0
    %v2418 = vadd.f32 %v2281, %v2417
    %v2419 = vpop.f32.mrb[0].mxu0
    %v2420 = vadd.f32 %v2283, %v2419
    %2421 = vmatprep.mubr.f32.mxu0 0.0
    %v2422 = vand.u32 %v1441, 4294901760
    %2423 = vmatmul.mubr.f32.gmra.mrb[0].mxu0 %v2422
    %v2424 = vpop.f32.mrb[0].mxu0
    %v2425 = vadd.f32 %v2288, %v2424
    %v2426 = vpop.f32.mrb[0].mxu0
    %v2427 = vadd.f32 %v2290, %v2426
    %2428 = vmatprep.mubr.f32.mxu0 0.0
    %v2429 = vand.u32 %v1444, 4294901760
    %2430 = vmatmul.mubr.f32.gmra.mrb[0].mxu0 %v2429
    %v2431 = vpop.f32.mrb[0].mxu0
    %v2432 = vadd.f32 %v2295, %v2431
    %v2433 = vpop.f32.mrb[0].mxu0
    %v2434 = vadd.f32 %v2297, %v2433
    %2435 = vdwg.mxu0
    %v2436 = vtanh.pop %v2383
    %v2437 = vtanh.pop %v2385
    %v2438 = vtanh.pop %v2390
    %v2439 = vtanh.pop %v2392
    %v2440 = vtanh.pop %v2397
    %v2441 = vtanh.pop %v2399
    %v2442 = vtanh.pop %v2404
    %v2443 = vtanh.pop %v2406
    %v2444 = vtanh.pop %v2411
    %v2445 = vtanh.pop %v2413
    %v2446 = vtanh.pop %v2418
    %v2447 = vtanh.pop %v2420
    %v2448 = vtanh.pop %v2425
    %v2449 = vtanh.pop %v2427
    %v2450 = vtanh.pop %v2432
    %v2451 = vtanh.pop %v2434
    %v2452 = vld [vmem:[%s7] sm:$0x7]
    %v2453 = vld [vmem:[%s8] sm:$0x7]
    %2455 = vset.pattern.permute.xlu0 0
    %2456 = vperm.xlu0 %2455, %v2453
    %v2457 = vpop.permute.xlu0 %2456
    %v2460 = vsel %vm335, %v2452, 0
    %v2462 = vand.u32 %v2437, 4294901760
    %2463 = vmatprep.subr.mxu0 %v2462
    %v2464 = vand.u32 %v2436, 4294901760
    %2465 = vmatpush1.msra.mxu0 %v2464
    %v2466 = vand.u32 %v2439, 4294901760
    %2467 = vmatprep.subr.mxu0 %v2466
    %v2468 = vand.u32 %v2438, 4294901760
    %2469 = vmatpush1.msra.mxu0 %v2468
    %v2470 = vand.u32 %v2441, 4294901760
    %2471 = vmatprep.subr.mxu0 %v2470
    %v2472 = vand.u32 %v2440, 4294901760
    %2473 = vmatpush1.msra.mxu0 %v2472
    %v2474 = vand.u32 %v2443, 4294901760
    %2475 = vmatprep.subr.mxu0 %v2474
    %v2476 = vand.u32 %v2442, 4294901760
    %2477 = vmatpush1.msra.mxu0 %v2476
    %v2478 = vand.u32 %v2445, 4294901760
    %2479 = vmatprep.subr.mxu0 %v2478
    %v2480 = vand.u32 %v2444, 4294901760
    %2481 = vmatpush1.msra.mxu0 %v2480
    %v2482 = vand.u32 %v2447, 4294901760
    %2483 = vmatprep.subr.mxu0 %v2482
    %v2484 = vand.u32 %v2446, 4294901760
    %2485 = vmatpush1.msra.mxu0 %v2484
    %v2486 = vand.u32 %v2449, 4294901760
    %2487 = vmatprep.subr.mxu0 %v2486
    %v2488 = vand.u32 %v2448, 4294901760
    %2489 = vmatpush1.msra.mxu0 %v2488
    %v2490 = vand.u32 %v2451, 4294901760
    %2491 = vmatprep.subr.mxu0 %v2490
    %v2492 = vand.u32 %v2450, 4294901760
    %2493 = vmatpush1.msra.mxu0 %v2492
    %2494 = vmatprep.subr.mxu0 0.0
    %2495 = vmatpush1.msra.mxu0 0.0
    %2496 = vmatprep.subr.mxu0 0.0
    %2497 = vmatpush1.msra.mxu0 0.0
    %2498 = vmatprep.subr.mxu0 0.0
    %2499 = vmatpush1.msra.mxu0 0.0
    %2500 = vmatprep.subr.mxu0 0.0
    %2501 = vmatpush1.msra.mxu0 0.0
    %2502 = vmatprep.subr.mxu0 0.0
    %2503 = vmatpush1.msra.mxu0 0.0
    %2504 = vmatprep.subr.mxu0 0.0
    %2505 = vmatpush1.msra.mxu0 0.0
    %2506 = vmatprep.subr.mxu0 0.0
    %2507 = vmatpush1.msra.mxu0 0.0
    %2508 = vmatprep.subr.mxu0 0.0
    %2509 = vmatpush1.msra.mxu0 0.0
    %2510 = vmatprep.subr.mxu0 0.0
    %2511 = vmatpush1.msra.mxu0 0.0
    %2512 = vmatprep.subr.mxu0 0.0
    %2513 = vmatpush1.msra.mxu0 0.0
    %2514 = vmatprep.subr.mxu0 0.0
    %2515 = vmatpush1.msra.mxu0 0.0
    %2516 = vmatprep.subr.mxu0 0.0
    %2517 = vmatpush1.msra.mxu0 0.0
    %2518 = vmatprep.subr.mxu0 0.0
    %2519 = vmatpush1.msra.mxu0 0.0
    %2520 = vmatprep.subr.mxu0 0.0
    %2521 = vmatpush1.msra.mxu0 0.0
    %2522 = vmatprep.subr.mxu0 0.0
    %2523 = vmatpush1.msra.mxu0 0.0
    %2524 = vmatprep.subr.mxu0 0.0
    %2525 = vmatpush1.msra.mxu0 0.0
    %2526 = vmatprep.subr.mxu0 0.0
    %2527 = vmatpush1.msra.mxu0 0.0
    %2528 = vmatprep.subr.mxu0 0.0
    %2529 = vmatpush1.msra.mxu0 0.0
    %2530 = vmatprep.subr.mxu0 0.0
    %2531 = vmatpush1.msra.mxu0 0.0
    %2532 = vmatprep.subr.mxu0 0.0
    %2533 = vmatpush1.msra.mxu0 0.0
    %2534 = vmatprep.subr.mxu0 0.0
    %2535 = vmatpush1.msra.mxu0 0.0
    %2536 = vmatprep.subr.mxu0 0.0
    %2537 = vmatpush1.msra.mxu0 0.0
    %2538 = vmatprep.subr.mxu0 0.0
    %2539 = vmatpush1.msra.mxu0 0.0
    %2540 = vmatprep.subr.mxu0 0.0
    %2541 = vmatpush1.msra.mxu0 0.0
    %2542 = vmatprep.mubr.f32.mxu0 0.0
    %v2543 = vand.u32 %v2460, 4294901760
    %v2544 = vsub.f32 %v2460, %v2543
    %v2545 = vand.u32 %v2544, 4294901760
    %v2546 = vsub.f32 %v2544, %v2545
    %v2547 = vand.u32 %v2546, 4294901760
    %2548 = vmatmul.mubr.f32.gmra.mrb[0].mxu0 %v2547
    %v2549 = vpop.f32.mrb[0].mxu0
    %v2550 = vadd.f32 %v2457, %v2549
    %v2551 = vpop.f32.mrb[0].mxu0
    %v2552 = vadd.f32 %v2457, %v2551
    %2553 = vdwg.mxu0
    %v2554 = vand.u32 %v2437, 4294901760
    %v2555 = vsub.f32 %v2437, %v2554
    %v2556 = vand.u32 %v2555, 4294901760
    %v2557 = vsub.f32 %v2555, %v2556
    %v2558 = vand.u32 %v2557, 4294901760
    %2559 = vmatprep.subr.mxu0 %v2558
    %v2560 = vand.u32 %v2436, 4294901760
    %v2561 = vsub.f32 %v2436, %v2560
    %v2562 = vand.u32 %v2561, 4294901760
    %v2563 = vsub.f32 %v2561, %v2562
    %v2564 = vand.u32 %v2563, 4294901760
    %2565 = vmatpush1.msra.mxu0 %v2564
    %v2566 = vand.u32 %v2439, 4294901760
    %v2567 = vsub.f32 %v2439, %v2566
    %v2568 = vand.u32 %v2567, 4294901760
    %v2569 = vsub.f32 %v2567, %v2568
    %v2570 = vand.u32 %v2569, 4294901760
    %2571 = vmatprep.subr.mxu0 %v2570
    %v2572 = vand.u32 %v2438, 4294901760
    %v2573 = vsub.f32 %v2438, %v2572
    %v2574 = vand.u32 %v2573, 4294901760
    %v2575 = vsub.f32 %v2573, %v2574
    %v2576 = vand.u32 %v2575, 4294901760
    %2577 = vmatpush1.msra.mxu0 %v2576
    %v2578 = vand.u32 %v2441, 4294901760
    %v2579 = vsub.f32 %v2441, %v2578
    %v2580 = vand.u32 %v2579, 4294901760
    %v2581 = vsub.f32 %v2579, %v2580
    %v2582 = vand.u32 %v2581, 4294901760
    %2583 = vmatprep.subr.mxu0 %v2582
    %v2584 = vand.u32 %v2440, 4294901760
    %v2585 = vsub.f32 %v2440, %v2584
    %v2586 = vand.u32 %v2585, 4294901760
    %v2587 = vsub.f32 %v2585, %v2586
    %v2588 = vand.u32 %v2587, 4294901760
    %2589 = vmatpush1.msra.mxu0 %v2588
    %v2590 = vand.u32 %v2443, 4294901760
    %v2591 = vsub.f32 %v2443, %v2590
    %v2592 = vand.u32 %v2591, 4294901760
    %v2593 = vsub.f32 %v2591, %v2592
    %v2594 = vand.u32 %v2593, 4294901760
    %2595 = vmatprep.subr.mxu0 %v2594
    %v2596 = vand.u32 %v2442, 4294901760
    %v2597 = vsub.f32 %v2442, %v2596
    %v2598 = vand.u32 %v2597, 4294901760
    %v2599 = vsub.f32 %v2597, %v2598
    %v2600 = vand.u32 %v2599, 4294901760
    %2601 = vmatpush1.msra.mxu0 %v2600
    %v2602 = vand.u32 %v2445, 4294901760
    %v2603 = vsub.f32 %v2445, %v2602
    %v2604 = vand.u32 %v2603, 4294901760
    %v2605 = vsub.f32 %v2603, %v2604
    %v2606 = vand.u32 %v2605, 4294901760
    %2607 = vmatprep.subr.mxu0 %v2606
    %v2608 = vand.u32 %v2444, 4294901760
    %v2609 = vsub.f32 %v2444, %v2608
    %v2610 = vand.u32 %v2609, 4294901760
    %v2611 = vsub.f32 %v2609, %v2610
    %v2612 = vand.u32 %v2611, 4294901760
    %2613 = vmatpush1.msra.mxu0 %v2612
    %v2614 = vand.u32 %v2447, 4294901760
    %v2615 = vsub.f32 %v2447, %v2614
    %v2616 = vand.u32 %v2615, 4294901760
    %v2617 = vsub.f32 %v2615, %v2616
    %v2618 = vand.u32 %v2617, 4294901760
    %2619 = vmatprep.subr.mxu0 %v2618
    %v2620 = vand.u32 %v2446, 4294901760
    %v2621 = vsub.f32 %v2446, %v2620
    %v2622 = vand.u32 %v2621, 4294901760
    %v2623 = vsub.f32 %v2621, %v2622
    %v2624 = vand.u32 %v2623, 4294901760
    %2625 = vmatpush1.msra.mxu0 %v2624
    %v2626 = vand.u32 %v2449, 4294901760
    %v2627 = vsub.f32 %v2449, %v2626
    %v2628 = vand.u32 %v2627, 4294901760
    %v2629 = vsub.f32 %v2627, %v2628
    %v2630 = vand.u32 %v2629, 4294901760
    %2631 = vmatprep.subr.mxu0 %v2630
    %v2632 = vand.u32 %v2448, 4294901760
    %v2633 = vsub.f32 %v2448, %v2632
    %v2634 = vand.u32 %v2633, 4294901760
    %v2635 = vsub.f32 %v2633, %v2634
    %v2636 = vand.u32 %v2635, 4294901760
    %2637 = vmatpush1.msra.mxu0 %v2636
    %v2638 = vand.u32 %v2451, 4294901760
    %v2639 = vsub.f32 %v2451, %v2638
    %v2640 = vand.u32 %v2639, 4294901760
    %v2641 = vsub.f32 %v2639, %v2640
    %v2642 = vand.u32 %v2641, 4294901760
    %2643 = vmatprep.subr.mxu0 %v2642
    %v2644 = vand.u32 %v2450, 4294901760
    %v2645 = vsub.f32 %v2450, %v2644
    %v2646 = vand.u32 %v2645, 4294901760
    %v2647 = vsub.f32 %v2645, %v2646
    %v2648 = vand.u32 %v2647, 4294901760
    %2649 = vmatpush1.msra.mxu0 %v2648
    %2650 = vmatprep.subr.mxu0 0.0
    %2651 = vmatpush1.msra.mxu0 0.0
    %2652 = vmatprep.subr.mxu0 0.0
    %2653 = vmatpush1.msra.mxu0 0.0
    %2654 = vmatprep.subr.mxu0 0.0
    %2655 = vmatpush1.msra.mxu0 0.0
    %2656 = vmatprep.subr.mxu0 0.0
    %2657 = vmatpush1.msra.mxu0 0.0
    %2658 = vmatprep.subr.mxu0 0.0
    %2659 = vmatpush1.msra.mxu0 0.0
    %2660 = vmatprep.subr.mxu0 0.0
    %2661 = vmatpush1.msra.mxu0 0.0
    %2662 = vmatprep.subr.mxu0 0.0
    %2663 = vmatpush1.msra.mxu0 0.0
    %2664 = vmatprep.subr.mxu0 0.0
    %2665 = vmatpush1.msra.mxu0 0.0
    %2666 = vmatprep.subr.mxu0 0.0
    %2667 = vmatpush1.msra.mxu0 0.0
    %2668 = vmatprep.subr.mxu0 0.0
    %2669 = vmatpush1.msra.mxu0 0.0
    %2670 = vmatprep.subr.mxu0 0.0
    %2671 = vmatpush1.msra.mxu0 0.0
    %2672 = vmatprep.subr.mxu0 0.0
    %2673 = vmatpush1.msra.mxu0 0.0
    %2674 = vmatprep.subr.mxu0 0.0
    %2675 = vmatpush1.msra.mxu0 0.0
    %2676 = vmatprep.subr.mxu0 0.0
    %2677 = vmatpush1.msra.mxu0 0.0
    %2678 = vmatprep.subr.mxu0 0.0
    %2679 = vmatpush1.msra.mxu0 0.0
    %2680 = vmatprep.subr.mxu0 0.0
    %2681 = vmatpush1.msra.mxu0 0.0
    %2682 = vmatprep.subr.mxu0 0.0
    %2683 = vmatpush1.msra.mxu0 0.0
    %2684 = vmatprep.subr.mxu0 0.0
    %2685 = vmatpush1.msra.mxu0 0.0
    %2686 = vmatprep.subr.mxu0 0.0
    %2687 = vmatpush1.msra.mxu0 0.0
    %2688 = vmatprep.subr.mxu0 0.0
    %2689 = vmatpush1.msra.mxu0 0.0
    %2690 = vmatprep.subr.mxu0 0.0
    %2691 = vmatpush1.msra.mxu0 0.0
    %2692 = vmatprep.subr.mxu0 0.0
    %2693 = vmatpush1.msra.mxu0 0.0
    %2694 = vmatprep.subr.mxu0 0.0
    %2695 = vmatpush1.msra.mxu0 0.0
    %2696 = vmatprep.subr.mxu0 0.0
    %2697 = vmatpush1.msra.mxu0 0.0
    %2698 = vmatprep.mubr.f32.mxu0 0.0
    %v2699 = vand.u32 %v2460, 4294901760
    %2700 = vmatmul.mubr.f32.gmra.mrb[0].mxu0 %v2699
    %v2701 = vpop.f32.mrb[0].mxu0
    %v2702 = vadd.f32 %v2550, %v2701
    %v2703 = vpop.f32.mrb[0].mxu0
    %v2704 = vadd.f32 %v2552, %v2703
    %2705 = vdwg.mxu0
    %v2706 = vand.u32 %v2437, 4294901760
    %v2707 = vsub.f32 %v2437, %v2706
    %2708 = vmatprep.subr.mxu0 %v2707
    %v2709 = vand.u32 %v2436, 4294901760
    %v2710 = vsub.f32 %v2436, %v2709
    %2711 = vmatpush1.msra.mxu0 %v2710
    %v2712 = vand.u32 %v2439, 4294901760
    %v2713 = vsub.f32 %v2439, %v2712
    %2714 = vmatprep.subr.mxu0 %v2713
    %v2715 = vand.u32 %v2438, 4294901760
    %v2716 = vsub.f32 %v2438, %v2715
    %2717 = vmatpush1.msra.mxu0 %v2716
    %v2718 = vand.u32 %v2441, 4294901760
    %v2719 = vsub.f32 %v2441, %v2718
    %2720 = vmatprep.subr.mxu0 %v2719
    %v2721 = vand.u32 %v2440, 4294901760
    %v2722 = vsub.f32 %v2440, %v2721
    %2723 = vmatpush1.msra.mxu0 %v2722
    %v2724 = vand.u32 %v2443, 4294901760
    %v2725 = vsub.f32 %v2443, %v2724
    %2726 = vmatprep.subr.mxu0 %v2725
    %v2727 = vand.u32 %v2442, 4294901760
    %v2728 = vsub.f32 %v2442, %v2727
    %2729 = vmatpush1.msra.mxu0 %v2728
    %v2730 = vand.u32 %v2445, 4294901760
    %v2731 = vsub.f32 %v2445, %v2730
    %2732 = vmatprep.subr.mxu0 %v2731
    %v2733 = vand.u32 %v2444, 4294901760
    %v2734 = vsub.f32 %v2444, %v2733
    %2735 = vmatpush1.msra.mxu0 %v2734
    %v2736 = vand.u32 %v2447, 4294901760
    %v2737 = vsub.f32 %v2447, %v2736
    %2738 = vmatprep.subr.mxu0 %v2737
    %v2739 = vand.u32 %v2446, 4294901760
    %v2740 = vsub.f32 %v2446, %v2739
    %2741 = vmatpush1.msra.mxu0 %v2740
    %v2742 = vand.u32 %v2449, 4294901760
    %v2743 = vsub.f32 %v2449, %v2742
    %2744 = vmatprep.subr.mxu0 %v2743
    %v2745 = vand.u32 %v2448, 4294901760
    %v2746 = vsub.f32 %v2448, %v2745
    %2747 = vmatpush1.msra.mxu0 %v2746
    %v2748 = vand.u32 %v2451, 4294901760
    %v2749 = vsub.f32 %v2451, %v2748
    %2750 = vmatprep.subr.mxu0 %v2749
    %v2751 = vand.u32 %v2450, 4294901760
    %v2752 = vsub.f32 %v2450, %v2751
    %2753 = vmatpush1.msra.mxu0 %v2752
    %2754 = vmatprep.subr.mxu0 0.0
    %2755 = vmatpush1.msra.mxu0 0.0
    %2756 = vmatprep.subr.mxu0 0.0
    %2757 = vmatpush1.msra.mxu0 0.0
    %2758 = vmatprep.subr.mxu0 0.0
    %2759 = vmatpush1.msra.mxu0 0.0
    %2760 = vmatprep.subr.mxu0 0.0
    %2761 = vmatpush1.msra.mxu0 0.0
    %2762 = vmatprep.subr.mxu0 0.0
    %2763 = vmatpush1.msra.mxu0 0.0
    %2764 = vmatprep.subr.mxu0 0.0
    %2765 = vmatpush1.msra.mxu0 0.0
    %2766 = vmatprep.subr.mxu0 0.0
    %2767 = vmatpush1.msra.mxu0 0.0
    %2768 = vmatprep.subr.mxu0 0.0
    %2769 = vmatpush1.msra.mxu0 0.0
    %2770 = vmatprep.subr.mxu0 0.0
    %2771 = vmatpush1.msra.mxu0 0.0
    %2772 = vmatprep.subr.mxu0 0.0
    %2773 = vmatpush1.msra.mxu0 0.0
    %2774 = vmatprep.subr.mxu0 0.0
    %2775 = vmatpush1.msra.mxu0 0.0
    %2776 = vmatprep.subr.mxu0 0.0
    %2777 = vmatpush1.msra.mxu0 0.0
    %2778 = vmatprep.subr.mxu0 0.0
    %2779 = vmatpush1.msra.mxu0 0.0
    %2780 = vmatprep.subr.mxu0 0.0
    %2781 = vmatpush1.msra.mxu0 0.0
    %2782 = vmatprep.subr.mxu0 0.0
    %2783 = vmatpush1.msra.mxu0 0.0
    %2784 = vmatprep.subr.mxu0 0.0
    %2785 = vmatpush1.msra.mxu0 0.0
    %2786 = vmatprep.subr.mxu0 0.0
    %2787 = vmatpush1.msra.mxu0 0.0
    %2788 = vmatprep.subr.mxu0 0.0
    %2789 = vmatpush1.msra.mxu0 0.0
    %2790 = vmatprep.subr.mxu0 0.0
    %2791 = vmatpush1.msra.mxu0 0.0
    %2792 = vmatprep.subr.mxu0 0.0
    %2793 = vmatpush1.msra.mxu0 0.0
    %2794 = vmatprep.subr.mxu0 0.0
    %2795 = vmatpush1.msra.mxu0 0.0
    %2796 = vmatprep.subr.mxu0 0.0
    %2797 = vmatpush1.msra.mxu0 0.0
    %2798 = vmatprep.subr.mxu0 0.0
    %2799 = vmatpush1.msra.mxu0 0.0
    %2800 = vmatprep.subr.mxu0 0.0
    %2801 = vmatpush1.msra.mxu0 0.0
    %2802 = vmatprep.mubr.f32.mxu0 0.0
    %v2803 = vand.u32 %v2460, 4294901760
    %v2804 = vsub.f32 %v2460, %v2803
    %2805 = vmatmul.mubr.f32.gmra.mrb[0].mxu0 %v2804
    %v2806 = vpop.f32.mrb[0].mxu0
    %v2807 = vadd.f32 %v2702, %v2806
    %v2808 = vpop.f32.mrb[0].mxu0
    %v2809 = vadd.f32 %v2704, %v2808
    %2810 = vdwg.mxu0
    %v2811 = vand.u32 %v2437, 4294901760
    %2812 = vmatprep.subr.mxu0 %v2811
    %v2813 = vand.u32 %v2436, 4294901760
    %2814 = vmatpush1.msra.mxu0 %v2813
    %v2815 = vand.u32 %v2439, 4294901760
    %2816 = vmatprep.subr.mxu0 %v2815
    %v2817 = vand.u32 %v2438, 4294901760
    %2818 = vmatpush1.msra.mxu0 %v2817
    %v2819 = vand.u32 %v2441, 4294901760
    %2820 = vmatprep.subr.mxu0 %v2819
    %v2821 = vand.u32 %v2440, 4294901760
    %2822 = vmatpush1.msra.mxu0 %v2821
    %v2823 = vand.u32 %v2443, 4294901760
    %2824 = vmatprep.subr.mxu0 %v2823
    %v2825 = vand.u32 %v2442, 4294901760
    %2826 = vmatpush1.msra.mxu0 %v2825
    %v2827 = vand.u32 %v2445, 4294901760
    %2828 = vmatprep.subr.mxu0 %v2827
    %v2829 = vand.u32 %v2444, 4294901760
    %2830 = vmatpush1.msra.mxu0 %v2829
    %v2831 = vand.u32 %v2447, 4294901760
    %2832 = vmatprep.subr.mxu0 %v2831
    %v2833 = vand.u32 %v2446, 4294901760
    %2834 = vmatpush1.msra.mxu0 %v2833
    %v2835 = vand.u32 %v2449, 4294901760
    %2836 = vmatprep.subr.mxu0 %v2835
    %v2837 = vand.u32 %v2448, 4294901760
    %2838 = vmatpush1.msra.mxu0 %v2837
    %v2839 = vand.u32 %v2451, 4294901760
    %2840 = vmatprep.subr.mxu0 %v2839
    %v2841 = vand.u32 %v2450, 4294901760
    %2842 = vmatpush1.msra.mxu0 %v2841
    %2843 = vmatprep.subr.mxu0 0.0
    %2844 = vmatpush1.msra.mxu0 0.0
    %2845 = vmatprep.subr.mxu0 0.0
    %2846 = vmatpush1.msra.mxu0 0.0
    %2847 = vmatprep.subr.mxu0 0.0
    %2848 = vmatpush1.msra.mxu0 0.0
    %2849 = vmatprep.subr.mxu0 0.0
    %2850 = vmatpush1.msra.mxu0 0.0
    %2851 = vmatprep.subr.mxu0 0.0
    %2852 = vmatpush1.msra.mxu0 0.0
    %2853 = vmatprep.subr.mxu0 0.0
    %2854 = vmatpush1.msra.mxu0 0.0
    %2855 = vmatprep.subr.mxu0 0.0
    %2856 = vmatpush1.msra.mxu0 0.0
    %2857 = vmatprep.subr.mxu0 0.0
    %2858 = vmatpush1.msra.mxu0 0.0
    %2859 = vmatprep.subr.mxu0 0.0
    %2860 = vmatpush1.msra.mxu0 0.0
    %2861 = vmatprep.subr.mxu0 0.0
    %2862 = vmatpush1.msra.mxu0 0.0
    %2863 = vmatprep.subr.mxu0 0.0
    %2864 = vmatpush1.msra.mxu0 0.0
    %2865 = vmatprep.subr.mxu0 0.0
    %2866 = vmatpush1.msra.mxu0 0.0
    %2867 = vmatprep.subr.mxu0 0.0
    %2868 = vmatpush1.msra.mxu0 0.0
    %2869 = vmatprep.subr.mxu0 0.0
    %2870 = vmatpush1.msra.mxu0 0.0
    %2871 = vmatprep.subr.mxu0 0.0
    %2872 = vmatpush1.msra.mxu0 0.0
    %2873 = vmatprep.subr.mxu0 0.0
    %2874 = vmatpush1.msra.mxu0 0.0
    %2875 = vmatprep.subr.mxu0 0.0
    %2876 = vmatpush1.msra.mxu0 0.0
    %2877 = vmatprep.subr.mxu0 0.0
    %2878 = vmatpush1.msra.mxu0 0.0
    %2879 = vmatprep.subr.mxu0 0.0
    %2880 = vmatpush1.msra.mxu0 0.0
    %2881 = vmatprep.subr.mxu0 0.0
    %2882 = vmatpush1.msra.mxu0 0.0
    %2883 = vmatprep.subr.mxu0 0.0
    %2884 = vmatpush1.msra.mxu0 0.0
    %2885 = vmatprep.subr.mxu0 0.0
    %2886 = vmatpush1.msra.mxu0 0.0
    %2887 = vmatprep.subr.mxu0 0.0
    %2888 = vmatpush1.msra.mxu0 0.0
    %2889 = vmatprep.subr.mxu0 0.0
    %2890 = vmatpush1.msra.mxu0 0.0
    %2891 = vmatprep.mubr.f32.mxu0 0.0
    %v2892 = vand.u32 %v2460, 4294901760
    %v2893 = vsub.f32 %v2460, %v2892
    %v2894 = vand.u32 %v2893, 4294901760
    %2895 = vmatmul.mubr.f32.gmra.mrb[0].mxu0 %v2894
    %v2896 = vpop.f32.mrb[0].mxu0
    %v2897 = vadd.f32 %v2807, %v2896
    %v2898 = vpop.f32.mrb[0].mxu0
    %v2899 = vadd.f32 %v2809, %v2898
    %2900 = vdwg.mxu0
    %v2901 = vand.u32 %v2437, 4294901760
    %v2902 = vsub.f32 %v2437, %v2901
    %v2903 = vand.u32 %v2902, 4294901760
    %2904 = vmatprep.subr.mxu0 %v2903
    %v2905 = vand.u32 %v2436, 4294901760
    %v2906 = vsub.f32 %v2436, %v2905
    %v2907 = vand.u32 %v2906, 4294901760
    %2908 = vmatpush1.msra.mxu0 %v2907
    %v2909 = vand.u32 %v2439, 4294901760
    %v2910 = vsub.f32 %v2439, %v2909
    %v2911 = vand.u32 %v2910, 4294901760
    %2912 = vmatprep.subr.mxu0 %v2911
    %v2913 = vand.u32 %v2438, 4294901760
    %v2914 = vsub.f32 %v2438, %v2913
    %v2915 = vand.u32 %v2914, 4294901760
    %2916 = vmatpush1.msra.mxu0 %v2915
    %v2917 = vand.u32 %v2441, 4294901760
    %v2918 = vsub.f32 %v2441, %v2917
    %v2919 = vand.u32 %v2918, 4294901760
    %2920 = vmatprep.subr.mxu0 %v2919
    %v2921 = vand.u32 %v2440, 4294901760
    %v2922 = vsub.f32 %v2440, %v2921
    %v2923 = vand.u32 %v2922, 4294901760
    %2924 = vmatpush1.msra.mxu0 %v2923
    %v2925 = vand.u32 %v2443, 4294901760
    %v2926 = vsub.f32 %v2443, %v2925
    %v2927 = vand.u32 %v2926, 4294901760
    %2928 = vmatprep.subr.mxu0 %v2927
    %v2929 = vand.u32 %v2442, 4294901760
    %v2930 = vsub.f32 %v2442, %v2929
    %v2931 = vand.u32 %v2930, 4294901760
    %2932 = vmatpush1.msra.mxu0 %v2931
    %v2933 = vand.u32 %v2445, 4294901760
    %v2934 = vsub.f32 %v2445, %v2933
    %v2935 = vand.u32 %v2934, 4294901760
    %2936 = vmatprep.subr.mxu0 %v2935
    %v2937 = vand.u32 %v2444, 4294901760
    %v2938 = vsub.f32 %v2444, %v2937
    %v2939 = vand.u32 %v2938, 4294901760
    %2940 = vmatpush1.msra.mxu0 %v2939
    %v2941 = vand.u32 %v2447, 4294901760
    %v2942 = vsub.f32 %v2447, %v2941
    %v2943 = vand.u32 %v2942, 4294901760
    %2944 = vmatprep.subr.mxu0 %v2943
    %v2945 = vand.u32 %v2446, 4294901760
    %v2946 = vsub.f32 %v2446, %v2945
    %v2947 = vand.u32 %v2946, 4294901760
    %2948 = vmatpush1.msra.mxu0 %v2947
    %v2949 = vand.u32 %v2449, 4294901760
    %v2950 = vsub.f32 %v2449, %v2949
    %v2951 = vand.u32 %v2950, 4294901760
    %2952 = vmatprep.subr.mxu0 %v2951
    %v2953 = vand.u32 %v2448, 4294901760
    %v2954 = vsub.f32 %v2448, %v2953
    %v2955 = vand.u32 %v2954, 4294901760
    %2956 = vmatpush1.msra.mxu0 %v2955
    %v2957 = vand.u32 %v2451, 4294901760
    %v2958 = vsub.f32 %v2451, %v2957
    %v2959 = vand.u32 %v2958, 4294901760
    %2960 = vmatprep.subr.mxu0 %v2959
    %v2961 = vand.u32 %v2450, 4294901760
    %v2962 = vsub.f32 %v2450, %v2961
    %v2963 = vand.u32 %v2962, 4294901760
    %2964 = vmatpush1.msra.mxu0 %v2963
    %2965 = vmatprep.subr.mxu0 0.0
    %2966 = vmatpush1.msra.mxu0 0.0
    %2967 = vmatprep.subr.mxu0 0.0
    %2968 = vmatpush1.msra.mxu0 0.0
    %2969 = vmatprep.subr.mxu0 0.0
    %2970 = vmatpush1.msra.mxu0 0.0
    %2971 = vmatprep.subr.mxu0 0.0
    %2972 = vmatpush1.msra.mxu0 0.0
    %2973 = vmatprep.subr.mxu0 0.0
    %2974 = vmatpush1.msra.mxu0 0.0
    %2975 = vmatprep.subr.mxu0 0.0
    %2976 = vmatpush1.msra.mxu0 0.0
    %2977 = vmatprep.subr.mxu0 0.0
    %2978 = vmatpush1.msra.mxu0 0.0
    %2979 = vmatprep.subr.mxu0 0.0
    %2980 = vmatpush1.msra.mxu0 0.0
    %2981 = vmatprep.subr.mxu0 0.0
    %2982 = vmatpush1.msra.mxu0 0.0
    %2983 = vmatprep.subr.mxu0 0.0
    %2984 = vmatpush1.msra.mxu0 0.0
    %2985 = vmatprep.subr.mxu0 0.0
    %2986 = vmatpush1.msra.mxu0 0.0
    %2987 = vmatprep.subr.mxu0 0.0
    %2988 = vmatpush1.msra.mxu0 0.0
    %2989 = vmatprep.subr.mxu0 0.0
    %2990 = vmatpush1.msra.mxu0 0.0
    %2991 = vmatprep.subr.mxu0 0.0
    %2992 = vmatpush1.msra.mxu0 0.0
    %2993 = vmatprep.subr.mxu0 0.0
    %2994 = vmatpush1.msra.mxu0 0.0
    %2995 = vmatprep.subr.mxu0 0.0
    %2996 = vmatpush1.msra.mxu0 0.0
    %2997 = vmatprep.subr.mxu0 0.0
    %2998 = vmatpush1.msra.mxu0 0.0
    %2999 = vmatprep.subr.mxu0 0.0
    %3000 = vmatpush1.msra.mxu0 0.0
    %3001 = vmatprep.subr.mxu0 0.0
    %3002 = vmatpush1.msra.mxu0 0.0
    %3003 = vmatprep.subr.mxu0 0.0
    %3004 = vmatpush1.msra.mxu0 0.0
    %3005 = vmatprep.subr.mxu0 0.0
    %3006 = vmatpush1.msra.mxu0 0.0
    %3007 = vmatprep.subr.mxu0 0.0
    %3008 = vmatpush1.msra.mxu0 0.0
    %3009 = vmatprep.subr.mxu0 0.0
    %3010 = vmatpush1.msra.mxu0 0.0
    %3011 = vmatprep.subr.mxu0 0.0
    %3012 = vmatpush1.msra.mxu0 0.0
    %3013 = vmatprep.mubr.f32.mxu0 0.0
    %v3014 = vand.u32 %v2460, 4294901760
    %3015 = vmatmul.mubr.f32.gmra.mrb[0].mxu0 %v3014
    %v3016 = vpop.f32.mrb[0].mxu0
    %v3017 = vadd.f32 %v2897, %v3016
    %v3018 = vpop.f32.mrb[0].mxu0
    %v3019 = vadd.f32 %v2899, %v3018
    %3020 = vdwg.mxu0
    %v3021 = vand.u32 %v2437, 4294901760
    %3022 = vmatprep.subr.mxu0 %v3021
    %v3023 = vand.u32 %v2436, 4294901760
    %3024 = vmatpush1.msra.mxu0 %v3023
    %v3025 = vand.u32 %v2439, 4294901760
    %3026 = vmatprep.subr.mxu0 %v3025
    %v3027 = vand.u32 %v2438, 4294901760
    %3028 = vmatpush1.msra.mxu0 %v3027
    %v3029 = vand.u32 %v2441, 4294901760
    %3030 = vmatprep.subr.mxu0 %v3029
    %v3031 = vand.u32 %v2440, 4294901760
    %3032 = vmatpush1.msra.mxu0 %v3031
    %v3033 = vand.u32 %v2443, 4294901760
    %3034 = vmatprep.subr.mxu0 %v3033
    %v3035 = vand.u32 %v2442, 4294901760
    %3036 = vmatpush1.msra.mxu0 %v3035
    %v3037 = vand.u32 %v2445, 4294901760
    %3038 = vmatprep.subr.mxu0 %v3037
    %v3039 = vand.u32 %v2444, 4294901760
    %3040 = vmatpush1.msra.mxu0 %v3039
    %v3041 = vand.u32 %v2447, 4294901760
    %3042 = vmatprep.subr.mxu0 %v3041
    %v3043 = vand.u32 %v2446, 4294901760
    %3044 = vmatpush1.msra.mxu0 %v3043
    %v3045 = vand.u32 %v2449, 4294901760
    %3046 = vmatprep.subr.mxu0 %v3045
    %v3047 = vand.u32 %v2448, 4294901760
    %3048 = vmatpush1.msra.mxu0 %v3047
    %v3049 = vand.u32 %v2451, 4294901760
    %3050 = vmatprep.subr.mxu0 %v3049
    %v3051 = vand.u32 %v2450, 4294901760
    %3052 = vmatpush1.msra.mxu0 %v3051
    %3053 = vmatprep.subr.mxu0 0.0
    %3054 = vmatpush1.msra.mxu0 0.0
    %3055 = vmatprep.subr.mxu0 0.0
    %3056 = vmatpush1.msra.mxu0 0.0
    %3057 = vmatprep.subr.mxu0 0.0
    %3058 = vmatpush1.msra.mxu0 0.0
    %3059 = vmatprep.subr.mxu0 0.0
    %3060 = vmatpush1.msra.mxu0 0.0
    %3061 = vmatprep.subr.mxu0 0.0
    %3062 = vmatpush1.msra.mxu0 0.0
    %3063 = vmatprep.subr.mxu0 0.0
    %3064 = vmatpush1.msra.mxu0 0.0
    %3065 = vmatprep.subr.mxu0 0.0
    %3066 = vmatpush1.msra.mxu0 0.0
    %3067 = vmatprep.subr.mxu0 0.0
    %3068 = vmatpush1.msra.mxu0 0.0
    %3069 = vmatprep.subr.mxu0 0.0
    %3070 = vmatpush1.msra.mxu0 0.0
    %3071 = vmatprep.subr.mxu0 0.0
    %3072 = vmatpush1.msra.mxu0 0.0
    %3073 = vmatprep.subr.mxu0 0.0
    %3074 = vmatpush1.msra.mxu0 0.0
    %3075 = vmatprep.subr.mxu0 0.0
    %3076 = vmatpush1.msra.mxu0 0.0
    %3077 = vmatprep.subr.mxu0 0.0
    %3078 = vmatpush1.msra.mxu0 0.0
    %3079 = vmatprep.subr.mxu0 0.0
    %3080 = vmatpush1.msra.mxu0 0.0
    %3081 = vmatprep.subr.mxu0 0.0
    %3082 = vmatpush1.msra.mxu0 0.0
    %3083 = vmatprep.subr.mxu0 0.0
    %3084 = vmatpush1.msra.mxu0 0.0
    %3085 = vmatprep.subr.mxu0 0.0
    %3086 = vmatpush1.msra.mxu0 0.0
    %3087 = vmatprep.subr.mxu0 0.0
    %3088 = vmatpush1.msra.mxu0 0.0
    %3089 = vmatprep.subr.mxu0 0.0
    %3090 = vmatpush1.msra.mxu0 0.0
    %3091 = vmatprep.subr.mxu0 0.0
    %3092 = vmatpush1.msra.mxu0 0.0
    %3093 = vmatprep.subr.mxu0 0.0
    %3094 = vmatpush1.msra.mxu0 0.0
    %3095 = vmatprep.subr.mxu0 0.0
    %3096 = vmatpush1.msra.mxu0 0.0
    %3097 = vmatprep.subr.mxu0 0.0
    %3098 = vmatpush1.msra.mxu0 0.0
    %3099 = vmatprep.subr.mxu0 0.0
    %3100 = vmatpush1.msra.mxu0 0.0
    %3101 = vmatprep.mubr.f32.mxu0 0.0
    %v3102 = vand.u32 %v2460, 4294901760
    %3103 = vmatmul.mubr.f32.gmra.mrb[0].mxu0 %v3102
    %v3104 = vpop.f32.mrb[0].mxu0
    %v3105 = vadd.f32 %v3017, %v3104
    %v3106 = vpop.f32.mrb[0].mxu0
    %v3107 = vadd.f32 %v3019, %v3106
    %3108 = vdwg.mxu0
    %v3111 = vcombine.low %v3105, %v3107
    %3113 = vst [vmem:[#allocation2] sm:$0x77] %v3111
    // Predicated region
    $region38: #{tpu_custom_call.1} parent=1 // pred_check
      _
    $region39: #{tpu_custom_call.1} parent=1 // pred_check_branch
      %3115 = sbr.rel (0) target = $region41
    $region40: #{tpu_custom_call.1} parent=1 // pred_region
      %s3117 = ssub.s32 128, 128
      %3118 = vsyncadd [#allocation3], %s3117
      %s3120 = sshll.u32 [#allocation2], 4
      %s3121 = int_to_ptr.vmem [resolvable:$true] %s3120
      %3123 = dma.vmem_to_hbm [thread:$0]  %s3121, 128, %s9, [#allocation3]
    $region41: #{tpu_custom_call.1} parent=1 // pred_fallthru
      _
    // Predicated region
    $region42: #{tpu_custom_call.1} parent=1 // pred_check
      _
    $region43: #{tpu_custom_call.1} parent=1 // pred_check_branch
      %3125 = sbr.rel (0) target = $region45
    $region44: #{tpu_custom_call.1} parent=1 // pred_region
      %3126 = dma.done [#allocation3], 128
    $region45: #{tpu_custom_call.1} parent=1 // pred_fallthru
      _
    %3127 = vsyncpa [#allocation3], 1

</llo_original>
